<compile_context>
chip_gen: v6e
topology: v6e:2x2x1
jax: 0.10.0
libtpu: 0.0.40
codegen_flags: <defaults>
</compile_context>

<pallas_src>
import functools

import jax
import jax.numpy as jnp
from jax import lax
from jax.experimental import pallas as pl
from jax.experimental.pallas import tpu as pltpu

# contract dim 0 of lhs with dim 0 of rhs (i.e. lhs is consumed "transposed")
_DN_00 = (((0,), (0,)), ((), ()))
# contract dim 1 of lhs with dim 1 of rhs (i.e. rhs is consumed "transposed")
_DN_11 = (((1,), (1,)), ((), ()))


def _self_attn_kernel(gamma_ref, x_ref, wq_ref, bq_ref, k_ref, v_ref,
                      out_ref, attn_ref, *, n_valid, n_pad):
    """Grid = (batch, query_tile).

    gamma_ref: (1,)          f32 SMEM scalar
    x_ref    : (1, C, TQ)    f32   -- current query tile of the flat feature map
    wq_ref   : (C, C8)       bf16  -- query 1x1-conv weight (channels-last)
    bq_ref   : (C8, 1)       f32
    k_ref    : (1, C8, Np)   bf16  -- per-batch key projection (resident)
    v_ref    : (1, C, Np)    bf16  -- per-batch value projection (resident)
    out_ref  : (1, C, TQ)    f32
    attn_ref : (1, TQ, Np)   attn dtype
    """
    xq = x_ref[0]                                                   # (C, TQ) f32

    # q[o, t] = sum_c wq[c, o] * x[c, t]   (1x1 conv == matmul over channels)
    q = lax.dot_general(wq_ref[...], xq.astype(jnp.bfloat16), _DN_00,
                        preferred_element_type=jnp.float32)         # (C8, TQ)
    q = (q + bq_ref[...]).astype(jnp.bfloat16)

    # energy[t, n] = <q[:, t], k[:, n]>  -- softmax over n (all keys resident)
    energy = lax.dot_general(q, k_ref[0], _DN_00,
                             preferred_element_type=jnp.float32)    # (TQ, Np)

    if n_pad != n_valid:                                            # mask padded keys
        key_idx = lax.broadcasted_iota(jnp.int32, energy.shape, 1)
        energy = jnp.where(key_idx < n_valid, energy, -1e30)

    m = jnp.max(energy, axis=-1, keepdims=True)
    p = jnp.exp(energy - m)
    denom = jnp.sum(p, axis=-1, keepdims=True)
    attn = p / denom                                                # exact normalize

    attn_ref[0] = attn.astype(attn_ref.dtype)

    # out[c, t] = sum_n v[c, n] * attn[t, n]   (== bmm(V, attn^T) in NCHW)
    out_cn = lax.dot_general(v_ref[0], attn.astype(jnp.bfloat16), _DN_11,
                             preferred_element_type=jnp.float32)    # (C, TQ)
    out_ref[0] = gamma_ref[0] * out_cn + xq


def self_attn_pallas(x_nchw, wq, wk, wv, bq, bk, bv, gamma,
                     *, attn_dtype=jnp.float32):
    """x_nchw: (B, C, W, H) f32.  Weights channels-last: wq/wk (C, C//8), wv (C, C)."""
    B, C, W, H = x_nchw.shape
    N = W * H
    C8 = wq.shape[1]

    n_pad = 128 * pl.cdiv(N, 128)                 # lane-dense key/attn width

    # Native NCHW flattening -> (B, C, N); NO transpose needed.
    x_cn = x_nchw.reshape(B, C, N).astype(jnp.float32)
    if n_pad != N:
        x_cn = jnp.pad(x_cn, ((0, 0), (0, 0), (0, n_pad - N)))

    # K/V projections hoisted out of the kernel (pipeline inputs, bf16 operands).
    k_bf = (jnp.einsum("bcn,co->bon", x_cn, wk)
            + bk[None, :, None]).astype(jnp.bfloat16)               # (B, C8, Np)
    v_bf = (jnp.einsum("bcn,co->bon", x_cn, wv)
            + bv[None, :, None]).astype(jnp.bfloat16)               # (B, C, Np)

    wq_bf = wq.astype(jnp.bfloat16)
    bq2 = bq.reshape(C8, 1).astype(jnp.float32)
    gamma_arr = jnp.asarray(gamma, dtype=jnp.float32).reshape(1)

    # --- generation-aware VMEM budgeting (v7x: 64 MiB/TC, v5e/v6e: 128 MiB) ---
    try:
        vmem_cap = int(pltpu.get_tpu_info().vmem_capacity_bytes)
    except Exception:
        vmem_cap = 64 * 1024 * 1024
    vmem_limit = min(int(vmem_cap * 0.85), 100 * 1024 * 1024)

    attn_bytes = jnp.dtype(attn_dtype).itemsize

    def vmem_need(tq):
        return (2 * C * tq * 4                    # x block   (double buffered)
                + 2 * C8 * n_pad * 2              # K block   (bf16)
                + 2 * C * n_pad * 2               # V block   (bf16)
                + 2 * C * tq * 4                  # out block
                + 2 * tq * n_pad * attn_bytes     # attn block
                + 3 * tq * n_pad * 4              # softmax temporaries (f32)
                + 2 * C * C8 * 2 + 4 * C8)        # weights / bias

    tq = 128
    if n_pad % 256 == 0 and vmem_need(256) <= (vmem_limit * 3) // 4:
        tq = 256                                   # fill the 256-wide MXU (v6e/v7x)
    n_qt = n_pad // tq

    kernel = functools.partial(_self_attn_kernel, n_valid=N, n_pad=n_pad)

    flops = 2 * B * (n_pad * C * C8 + n_pad * n_pad * C8 + n_pad * n_pad * C)
    bytes_accessed = B * (4 * C * n_pad          # x in
                          + 2 * (C8 + C) * n_pad  # K, V in
                          + 4 * C * n_pad         # out
                          + attn_bytes * n_pad * n_pad)
    cost = pl.CostEstimate(flops=flops, transcendentals=B * n_pad * n_pad,
                           bytes_accessed=bytes_accessed)

    out_cn, attn = pl.pallas_call(
        kernel,
        out_shape=(
            jax.ShapeDtypeStruct((B, C, n_pad), jnp.float32),
            jax.ShapeDtypeStruct((B, n_pad, n_pad), attn_dtype),
        ),
        grid_spec=pltpu.PrefetchScalarGridSpec(
            num_scalar_prefetch=0,
            grid=(B, n_qt),
            in_specs=[
                pl.BlockSpec(memory_space=pltpu.MemorySpace.SMEM),     # gamma (1,)
                pl.BlockSpec((1, C, tq), lambda b, q: (b, 0, q)),      # x tile
                pl.BlockSpec((C, C8), lambda b, q: (0, 0)),            # wq (bf16)
                pl.BlockSpec((C8, 1), lambda b, q: (0, 0)),            # bq
                pl.BlockSpec((1, C8, n_pad), lambda b, q: (b, 0, 0)),  # K (per batch)
                pl.BlockSpec((1, C, n_pad), lambda b, q: (b, 0, 0)),   # V (per batch)
            ],
            out_specs=[
                pl.BlockSpec((1, C, tq), lambda b, q: (b, 0, q)),      # out (B,C,N)
                pl.BlockSpec((1, tq, n_pad), lambda b, q: (b, q, 0)),  # attention
            ],
        ),
        compiler_params=pltpu.CompilerParams(
            dimension_semantics=("parallel", "parallel"),
            vmem_limit_bytes=vmem_limit,
        ),
        cost_estimate=cost,
    )(gamma_arr, x_cn, wq_bf, bq2, k_bf, v_bf)

    out_nchw = out_cn[:, :, :N].reshape(B, C, W, H)                  # no transpose
    attention = attn[:, :N, :N]
    return out_nchw, attention


def self_attn_reference(x_nchw, wq, wk, wv, bq, bk, bv, gamma):
    """Pure-JAX f32 reference mirroring the PyTorch forward."""
    B, C, W, H = x_nchw.shape
    N = W * H
    x_flat = x_nchw.reshape(B, C, N)                                   # (B, C, N)
    q = jnp.einsum("bcn,co->bon", x_flat, wq) + bq[None, :, None]      # (B, C//8, N)
    k = jnp.einsum("bcn,co->bon", x_flat, wk) + bk[None, :, None]
    v = jnp.einsum("bcn,co->bon", x_flat, wv) + bv[None, :, None]      # (B, C, N)
    proj_query = jnp.transpose(q, (0, 2, 1))                           # (B, N, C//8)
    energy = jnp.einsum("bnd,bdm->bnm", proj_query, k)                 # (B, N, N)
    attention = jax.nn.softmax(energy, axis=-1)
    out = jnp.einsum("bcn,bmn->bcm", v, attention)                     # bmm(V, attn^T)
    out = out.reshape(B, C, W, H)
    out = gamma * out + x_nchw
    return out, attention


def _run_case(key, B, C, W, H, gamma):
    C8 = C // 8
    k1, k2, k3, k4, k5, k6, k7 = jax.random.split(key, 7)
    x = jax.random.normal(k1, (B, C, W, H), dtype=jnp.float32)
    wq = jax.random.normal(k2, (C, C8), dtype=jnp.float32) * 0.05
    wk = jax.random.normal(k3, (C, C8), dtype=jnp.float32) * 0.05
    wv = jax.random.normal(k4, (C, C), dtype=jnp.float32) * 0.05
    bq = jax.random.normal(k5, (C8,), dtype=jnp.float32) * 0.05
    bk = jax.random.normal(k6, (C8,), dtype=jnp.float32) * 0.05
    bv = jax.random.normal(k7, (C,), dtype=jnp.float32) * 0.05

    out, attn = self_attn_pallas(x, wq, wk, wv, bq, bk, bv, gamma)
    out = jax.block_until_ready(out)
    attn = jax.block_until_ready(attn)

    out_ref, attn_ref = self_attn_reference(x, wq, wk, wv, bq, bk, bv, gamma)
    N = W * H
    assert out.shape == (B, C, W, H) and attn.shape == (B, N, N)
    # bf16 matmul operands (f32 accumulation) -> loosened tolerances.
    assert jnp.allclose(attn, attn_ref, atol=2e-3, rtol=2e-2)
    assert jnp.allclose(out, out_ref, atol=2e-2, rtol=2e-2)


if __name__ == "__main__":
    key = jax.random.PRNGKey(0)
    k_a, k_b = jax.random.split(key)

    # Main case: in_dim = 64 -> C//8 = 8, N = 256 (multiple of 128).
    _run_case(k_a, B=2, C=64, W=16, H=16, gamma=0.5)
    # Padding path: N = 36 (not a multiple of 128) -> padded to 128 + key masking.
    _run_case(k_b, B=2, C=64, W=6, H=6, gamma=0.7)

    print("KERNEL_OK")
</pallas_src>

<mosaic_0001>
module attributes {stable_mosaic.version = 11 : i64} {
  func.func @_self_attn_kernel(%arg0: i32, %arg1: i32, %arg2: memref<1xf32, #tpu.memory_space<smem>>, %arg3: memref<1x64x256xf32, #tpu.memory_space<vmem>>, %arg4: memref<64x8xbf16, #tpu.memory_space<vmem>>, %arg5: memref<8x1xf32, #tpu.memory_space<vmem>>, %arg6: memref<1x8x256xbf16, #tpu.memory_space<vmem>>, %arg7: memref<1x64x256xbf16, #tpu.memory_space<vmem>>, %arg8: memref<1x64x256xf32, #tpu.memory_space<vmem>>, %arg9: memref<1x256x256xf32, #tpu.memory_space<vmem>>) attributes {dimension_semantics = [#tpu.dimension_semantics<parallel>, #tpu.dimension_semantics<parallel>], iteration_bounds = array<i64: 2, 1>, scalar_prefetch = 0 : i64, scratch_operands = 0 : i64, tpu.core_type = #tpu.core_type<tc>, window_params = [{transform_indices = @transform_0, window_bounds = array<i64: 1>}, {transform_indices = @transform_1, window_bounds = array<i64: 1, 64, 256>}, {pipeline_mode = #tpu.pipeline_mode<synchronous>, transform_indices = @transform_2, window_bounds = array<i64: 64, 8>}, {pipeline_mode = #tpu.pipeline_mode<synchronous>, transform_indices = @transform_3, window_bounds = array<i64: 8, 1>}, {transform_indices = @transform_4, window_bounds = array<i64: 1, 8, 256>}, {transform_indices = @transform_5, window_bounds = array<i64: 1, 64, 256>}, {transform_indices = @transform_6, window_bounds = array<i64: 1, 64, 256>}, {transform_indices = @transform_7, window_bounds = array<i64: 1, 256, 256>}]} {
    %c0 = arith.constant 0 : index
    %c0_0 = arith.constant 0 : index
    %c0_1 = arith.constant 0 : index
    %0 = vector.load %arg3[%c0, %c0_0, %c0_1] : memref<1x64x256xf32, #tpu.memory_space<vmem>>, vector<1x64x256xf32>
    %1 = vector.shape_cast %0 : vector<1x64x256xf32> to vector<64x256xf32>
    %c0_2 = arith.constant 0 : index
    %c0_3 = arith.constant 0 : index
    %2 = vector.load %arg4[%c0_2, %c0_3] : memref<64x8xbf16, #tpu.memory_space<vmem>>, vector<64x8xbf16>
    %3 = arith.truncf %1 : vector<64x256xf32> to vector<64x256xbf16>
    %cst = arith.constant dense<0.000000e+00> : vector<8x256xf32>
    %4 = tpu.matmul %2, %3, %cst {dimension_numbers = #tpu.dot_dimension_numbers<[0], [0], [1], [1], [0, 1, 1, 1], [], []>} : vector<64x8xbf16>, vector<64x256xbf16>, vector<8x256xf32> -> vector<8x256xf32>
    %c0_4 = arith.constant 0 : index
    %c0_5 = arith.constant 0 : index
    %5 = vector.load %arg5[%c0_4, %c0_5] : memref<8x1xf32, #tpu.memory_space<vmem>>, vector<8x1xf32>
    %6 = vector.broadcast %5 : vector<8x1xf32> to vector<8x256xf32>
    %7 = arith.addf %4, %6 : vector<8x256xf32>
    %8 = arith.truncf %7 : vector<8x256xf32> to vector<8x256xbf16>
    %c0_6 = arith.constant 0 : index
    %c0_7 = arith.constant 0 : index
    %c0_8 = arith.constant 0 : index
    %9 = vector.load %arg6[%c0_6, %c0_7, %c0_8] : memref<1x8x256xbf16, #tpu.memory_space<vmem>>, vector<1x8x256xbf16>
    %10 = vector.shape_cast %9 : vector<1x8x256xbf16> to vector<8x256xbf16>
    %cst_9 = arith.constant dense<0.000000e+00> : vector<256x256xf32>
    %11 = tpu.matmul %8, %10, %cst_9 {dimension_numbers = #tpu.dot_dimension_numbers<[0], [0], [1], [1], [0, 1, 1, 1], [], []>} : vector<8x256xbf16>, vector<8x256xbf16>, vector<256x256xf32> -> vector<256x256xf32>
    %cst_10 = arith.constant dense<0xFF800000> : vector<256xf32>
    %12 = vector.multi_reduction <maximumf>, %11, %cst_10 [1] : vector<256x256xf32> to vector<256xf32>
    %13 = vector.shape_cast %12 : vector<256xf32> to vector<256x1xf32>
    %14 = vector.broadcast %13 : vector<256x1xf32> to vector<256x256xf32>
    %15 = arith.subf %11, %14 : vector<256x256xf32>
    %16 = math.exp %15 : vector<256x256xf32>
    %cst_11 = arith.constant dense<0.000000e+00> : vector<256xf32>
    %17 = vector.multi_reduction <add>, %16, %cst_11 [1] : vector<256x256xf32> to vector<256xf32>
    %18 = vector.shape_cast %17 : vector<256xf32> to vector<256x1xf32>
    %19 = vector.broadcast %18 : vector<256x1xf32> to vector<256x256xf32>
    %20 = arith.divf %16, %19 : vector<256x256xf32>
    %c0_12 = arith.constant 0 : index
    %c0_13 = arith.constant 0 : index
    %c0_14 = arith.constant 0 : index
    %21 = vector.load %arg9[%c0_12, %c0_13, %c0_14] : memref<1x256x256xf32, #tpu.memory_space<vmem>>, vector<1x256x256xf32>
    %22 = vector.shape_cast %21 : vector<1x256x256xf32> to vector<256x256xf32>
    %23 = vector.shape_cast %20 : vector<256x256xf32> to vector<1x256x256xf32>
    tpu.vector_store %arg9[%c0_12, %c0_13, %c0_14], %23 {strides = array<i32>} : memref<1x256x256xf32, #tpu.memory_space<vmem>>, vector<1x256x256xf32>,
    %c0_15 = arith.constant 0 : index
    %c0_16 = arith.constant 0 : index
    %c0_17 = arith.constant 0 : index
    %24 = vector.load %arg7[%c0_15, %c0_16, %c0_17] : memref<1x64x256xbf16, #tpu.memory_space<vmem>>, vector<1x64x256xbf16>
    %25 = vector.shape_cast %24 : vector<1x64x256xbf16> to vector<64x256xbf16>
    %26 = arith.truncf %20 : vector<256x256xf32> to vector<256x256xbf16>
    %cst_18 = arith.constant dense<0.000000e+00> : vector<64x256xf32>
    %27 = tpu.matmul %25, %26, %cst_18 {dimension_numbers = #tpu.dot_dimension_numbers<[1], [1], [0], [0], [0, 0, 1, 0], [], []>} : vector<64x256xbf16>, vector<256x256xbf16>, vector<64x256xf32> -> vector<64x256xf32>
    %c0_19 = arith.constant 0 : index
    %28 = memref.load %arg2[%c0_19] : memref<1xf32, #tpu.memory_space<smem>>
    %29 = vector.broadcast %28 : f32 to vector<64x256xf32>
    %30 = arith.mulf %29, %27 : vector<64x256xf32>
    %31 = arith.addf %30, %1 : vector<64x256xf32>
    %c0_20 = arith.constant 0 : index
    %c0_21 = arith.constant 0 : index
    %c0_22 = arith.constant 0 : index
    %32 = vector.load %arg8[%c0_20, %c0_21, %c0_22] : memref<1x64x256xf32, #tpu.memory_space<vmem>>, vector<1x64x256xf32>
    %33 = vector.shape_cast %32 : vector<1x64x256xf32> to vector<64x256xf32>
    %34 = vector.shape_cast %31 : vector<64x256xf32> to vector<1x64x256xf32>
    tpu.vector_store %arg8[%c0_20, %c0_21, %c0_22], %34 {strides = array<i32>} : memref<1x64x256xf32, #tpu.memory_space<vmem>>, vector<1x64x256xf32>,
    return
  }
  func.func @transform_0(%arg0: i32, %arg1: i32) -> i32 {
    %c0_i32 = arith.constant 0 : i32
    %c0_i32_0 = arith.constant 0 : i32
    return %c0_i32 : i32
  }
  func.func @transform_1(%arg0: i32, %arg1: i32) -> (i32, i32, i32) {
    %c0_i32 = arith.constant 0 : i32
    %c0_i32_0 = arith.constant 0 : i32
    return %arg0, %c0_i32, %arg1 : i32, i32, i32
  }
  func.func @transform_2(%arg0: i32, %arg1: i32) -> (i32, i32) {
    %c0_i32 = arith.constant 0 : i32
    %c0_i32_0 = arith.constant 0 : i32
    %c0_i32_1 = arith.constant 0 : i32
    return %c0_i32, %c0_i32_0 : i32, i32
  }
  func.func @transform_3(%arg0: i32, %arg1: i32) -> (i32, i32) {
    %c0_i32 = arith.constant 0 : i32
    %c0_i32_0 = arith.constant 0 : i32
    %c0_i32_1 = arith.constant 0 : i32
    return %c0_i32, %c0_i32_0 : i32, i32
  }
  func.func @transform_4(%arg0: i32, %arg1: i32) -> (i32, i32, i32) {
    %c0_i32 = arith.constant 0 : i32
    %c0_i32_0 = arith.constant 0 : i32
    %c0_i32_1 = arith.constant 0 : i32
    return %arg0, %c0_i32, %c0_i32_0 : i32, i32, i32
  }
  func.func @transform_5(%arg0: i32, %arg1: i32) -> (i32, i32, i32) {
    %c0_i32 = arith.constant 0 : i32
    %c0_i32_0 = arith.constant 0 : i32
    %c0_i32_1 = arith.constant 0 : i32
    return %arg0, %c0_i32, %c0_i32_0 : i32, i32, i32
  }
  func.func @transform_6(%arg0: i32, %arg1: i32) -> (i32, i32, i32) {
    %c0_i32 = arith.constant 0 : i32
    %c0_i32_0 = arith.constant 0 : i32
    return %arg0, %c0_i32, %arg1 : i32, i32, i32
  }
  func.func @transform_7(%arg0: i32, %arg1: i32) -> (i32, i32, i32) {
    %c0_i32 = arith.constant 0 : i32
    %c0_i32_0 = arith.constant 0 : i32
    return %arg0, %arg1, %c0_i32 : i32, i32, i32
  }
}

</mosaic_0001>

<llo_original>
// kernel: tpu_custom_call.1
$region0: #{tpu_custom_call.1}
  #allocation0 [shape = 'u32[]', space=smem, size = 0x4, offset = 0x4, fixed_abs, tag = 'smem constant byte address 0x4 - core index']
  #allocation1 [shape = 'u32[144,128]{1,0:T(1,128)}', space=vmem, size = 0x12000, scoped, tag = 'internal scratch']
  #allocation2 [shape = 'f32[1]{0:T(128)S(6)}', space=smem, size = 0x200, scoped, tag = 'scoped memory for tpu_custom_call.1']
  %s0 = inlined_call_operand.<no memory space> [shape: f32[1], index: 0, kind: input, shape index: {}]
  %s1 = inlined_call_operand.hbm [shape: f32[2,64,256], index: 1, kind: input, shape index: {}]
  %s2 = inlined_call_operand.vmem [shape: bf16[64,8], index: 2, kind: input, shape index: {}]
  %s3 = inlined_call_operand.vmem [shape: f32[8,1], index: 3, kind: input, shape index: {}]
  %s4 = inlined_call_operand.vmem [shape: bf16[2,8,256], index: 4, kind: input, shape index: {}]
  %s5 = inlined_call_operand.hbm [shape: bf16[2,64,256], index: 5, kind: input, shape index: {}]
  %s6 = inlined_call_operand.hbm [shape: f32[2,64,256], index: 6, kind: output, shape index: {0}]
  %s7 = inlined_call_operand.hbm [shape: f32[2,256,256], index: 7, kind: output, shape index: {1}]
  %8 = xla_tuple %s6, %s7
  %s9 = sld [smem:[#allocation0]]
  $region73: #{tpu_custom_call.1} parent=0
    _
  %s11 = ssub.s32 1, %s9
  %s12 = scalar_select 0, %s11, %s9
  %13 = sst [smem:[#allocation2]] %s0
  $region1: #{tpu_custom_call.1} parent=0
    #allocation3 [shape = 'u8[131072]{0}', space=vmem, size = 0x20000, scoped, tag = 'input window, operand 1']
    #allocation4 [shape = 's32[2]{0}', space=sflag, size = 0x8, scoped, tag = 'scoped memory for tpu_custom_call.1']
    #allocation5 [shape = 's32[2]{0}', space=sflag, size = 0x8, scoped, tag = 'scoped memory for tpu_custom_call.1']
    #allocation6 [shape = 'u8[65536]{0}', space=vmem, size = 0x10000, scoped, tag = 'input window, operand 5']
    #allocation7 [shape = 's32[2]{0}', space=sflag, size = 0x8, scoped, tag = 'scoped memory for tpu_custom_call.1']
    #allocation8 [shape = 'u8[131072]{0}', space=vmem, size = 0x20000, scoped, tag = 'output window, operand 0']
    #allocation9 [shape = 'u8[524288]{0}', space=vmem, size = 0x80000, scoped, tag = 'output window, operand 1']
    #allocation10 [shape = 's32[2]{0}', space=sflag, size = 0x8, scoped, tag = 'scoped memory for tpu_custom_call.1']
    %14 = vsyncpa [#allocation4], 0
    %s15 = scalar_lea.sflag [#allocation4], 1
    %16 = vsyncpa %s15, 0
    %17 = vsyncpa [#allocation7], 0
    %s18 = scalar_lea.sflag [#allocation7], 1
    %19 = vsyncpa %s18, 0
    %20 = vsyncpa [#allocation5], 0
    %s21 = scalar_lea.sflag [#allocation5], 1
    %22 = vsyncpa %s21, 0
    %23 = vsyncpa [#allocation10], 0
    %s24 = scalar_lea.sflag [#allocation10], 1
    %25 = vsyncpa %s24, 0
    loop: start=0, step=1, limit=4
    $region2: #{tpu_custom_call.1} parent=1 // loop_pre_header
      _
    $region3: #{tpu_custom_call.1} parent=1 // loop_header
      %s27 = sphi 0, %s31
      %p28 = scmp.ge.s32.totalorder %s27, 4
      %s34 = sphi 0, %s46
      %s35 = sphi 0, %s42
      %s36 = sphi 0, %s34
      %s37 = sphi 0, %s35
      %s38 = sphi 0, %s36
      %s39 = sphi 0, %s37
      %s47 = sphi 0, %s47
      %s49 = sphi 0, %s47
      %s50 = sphi 0, %s49
      %s64 = sphi 0, %s50
      %s72 = sphi 0, %s74
      %s75 = sphi 0, %s72
      %s76 = sphi 0, %s75
      %s92 = sphi 0, %s76
      %s96 = sphi 0, %s96
      %s98 = sphi 0, %s96
      %s99 = sphi 0, %s98
      %s113 = sphi 0, %s99
      %s117 = sphi 0, %s117
      %s119 = sphi 0, %s117
      %s120 = sphi 0, %s119
      %s134 = sphi 0, %s120
      %s140 = sphi 0, %s142
      %s143 = sphi 0, %s140
      %s144 = sphi 0, %s143
      %s160 = sphi 0, %s144
      %s166 = sphi 0, %s168
      %s169 = sphi 0, %s166
      %s170 = sphi 0, %s169
      %s186 = sphi 0, %s170
      %s194 = sphi 0, %s196
      %s197 = sphi 0, %s194
      %s198 = sphi 0, %s197
      %s214 = sphi 0, %s198
      %s222 = sphi 0, %s224
      %s225 = sphi 0, %s222
      %s226 = sphi 0, %s225
      %s242 = sphi 0, %s226
    $region4: #{tpu_custom_call.1} parent=1 // loop_header_branch
      %30 = sbr.rel (%p28) target = $region8
    $region5: #{tpu_custom_call.1} parent=1 // loop_body
      %s32 = ssub.s32 %s27, 1
      %s33 = ssub.s32 %s27, 2
      %s40 = sadd.s32 1, %s35
      %p41 = scmp.ge.s32.totalorder %s40, 1
      %s42 = scalar_select %p41, 0, %s40
      %s43 = sadd.s32 1, %s34
      %s44 = scalar_select %p41, %s43, %s34
      %p45 = scmp.ge.s32.totalorder %s44, 2
      %s46 = scalar_select %p45, 0, %s44
      %s48 = sadd.s32 %s47, 1
      %p51 = scmp.eq.s32.totalorder %s27, 1
      %p52 = scmp.ne.s32.totalorder %s47, %s49
      %p53 = scmp.eq.s32.totalorder %s27, 0
      %p54 = por %p52, %p53
      %p55 = scmp.ne.s32.totalorder %s47, %s49
      %p56 = scmp.eq.s32.totalorder %s32, 1
      %p57 = por %p55, %p56
      %p58 = scmp.ne.s32.totalorder %s49, %s50
      %p59 = scmp.eq.s32.totalorder %s32, 0
      %p60 = por %p58, %p59
      %p61 = scmp.ne.s32.totalorder %s49, %s50
      %p62 = scmp.eq.s32.totalorder %s33, 1
      %p63 = por %p61, %p62
      %p65 = scmp.ne.s32.totalorder %s50, %s64
      %p66 = scmp.eq.s32.totalorder %s33, 0
      %p67 = por %p65, %p66
      %s68 = ssub.s32 %s34, %s46
      %s69 = ssub.s32 %s35, %s42
      %s70 = sor.u32 %s68, %s69
      %p71 = scmp.eq.s32.totalorder %s70, 0
      %s73 = sadd.s32 %s72, 1
      %s74 = scalar_select %p71, %s72, %s73
      %p77 = pneg %p71
      %p78 = scmp.eq.s32.totalorder %s27, 1
      %p79 = por %p77, %p78
      %p80 = scmp.ne.s32.totalorder %s72, %s75
      %p81 = scmp.eq.s32.totalorder %s27, 0
      %p82 = por %p80, %p81
      %p83 = scmp.ne.s32.totalorder %s72, %s75
      %p84 = scmp.eq.s32.totalorder %s32, 1
      %p85 = por %p83, %p84
      %p86 = scmp.ne.s32.totalorder %s75, %s76
      %p87 = scmp.eq.s32.totalorder %s32, 0
      %p88 = por %p86, %p87
      %p89 = scmp.ne.s32.totalorder %s75, %s76
      %p90 = scmp.eq.s32.totalorder %s33, 1
      %p91 = por %p89, %p90
      %p93 = scmp.ne.s32.totalorder %s76, %s92
      %p94 = scmp.eq.s32.totalorder %s33, 0
      %p95 = por %p93, %p94
      %s97 = sadd.s32 %s96, 1
      %p100 = scmp.eq.s32.totalorder %s27, 1
      %p101 = scmp.ne.s32.totalorder %s96, %s98
      %p102 = scmp.eq.s32.totalorder %s27, 0
      %p103 = por %p101, %p102
      %p104 = scmp.ne.s32.totalorder %s96, %s98
      %p105 = scmp.eq.s32.totalorder %s32, 1
      %p106 = por %p104, %p105
      %p107 = scmp.ne.s32.totalorder %s98, %s99
      %p108 = scmp.eq.s32.totalorder %s32, 0
      %p109 = por %p107, %p108
      %p110 = scmp.ne.s32.totalorder %s98, %s99
      %p111 = scmp.eq.s32.totalorder %s33, 1
      %p112 = por %p110, %p111
      %p114 = scmp.ne.s32.totalorder %s99, %s113
      %p115 = scmp.eq.s32.totalorder %s33, 0
      %p116 = por %p114, %p115
      %s118 = sadd.s32 %s117, 1
      %p121 = scmp.eq.s32.totalorder %s27, 1
      %p122 = scmp.ne.s32.totalorder %s117, %s119
      %p123 = scmp.eq.s32.totalorder %s27, 0
      %p124 = por %p122, %p123
      %p125 = scmp.ne.s32.totalorder %s117, %s119
      %p126 = scmp.eq.s32.totalorder %s32, 1
      %p127 = por %p125, %p126
      %p128 = scmp.ne.s32.totalorder %s119, %s120
      %p129 = scmp.eq.s32.totalorder %s32, 0
      %p130 = por %p128, %p129
      %p131 = scmp.ne.s32.totalorder %s119, %s120
      %p132 = scmp.eq.s32.totalorder %s33, 1
      %p133 = por %p131, %p132
      %p135 = scmp.ne.s32.totalorder %s120, %s134
      %p136 = scmp.eq.s32.totalorder %s33, 0
      %p137 = por %p135, %p136
      %s138 = ssub.s32 %s34, %s46
      %p139 = scmp.eq.s32.totalorder %s138, 0
      %s141 = sadd.s32 %s140, 1
      %s142 = scalar_select %p139, %s140, %s141
      %p145 = pneg %p139
      %p146 = scmp.eq.s32.totalorder %s27, 1
      %p147 = por %p145, %p146
      %p148 = scmp.ne.s32.totalorder %s140, %s143
      %p149 = scmp.eq.s32.totalorder %s27, 0
      %p150 = por %p148, %p149
      %p151 = scmp.ne.s32.totalorder %s140, %s143
      %p152 = scmp.eq.s32.totalorder %s32, 1
      %p153 = por %p151, %p152
      %p154 = scmp.ne.s32.totalorder %s143, %s144
      %p155 = scmp.eq.s32.totalorder %s32, 0
      %p156 = por %p154, %p155
      %p157 = scmp.ne.s32.totalorder %s143, %s144
      %p158 = scmp.eq.s32.totalorder %s33, 1
      %p159 = por %p157, %p158
      %p161 = scmp.ne.s32.totalorder %s144, %s160
      %p162 = scmp.eq.s32.totalorder %s33, 0
      %p163 = por %p161, %p162
      %s164 = ssub.s32 %s34, %s46
      %p165 = scmp.eq.s32.totalorder %s164, 0
      %s167 = sadd.s32 %s166, 1
      %s168 = scalar_select %p165, %s166, %s167
      %p171 = pneg %p165
      %p172 = scmp.eq.s32.totalorder %s27, 1
      %p173 = por %p171, %p172
      %p174 = scmp.ne.s32.totalorder %s166, %s169
      %p175 = scmp.eq.s32.totalorder %s27, 0
      %p176 = por %p174, %p175
      %p177 = scmp.ne.s32.totalorder %s166, %s169
      %p178 = scmp.eq.s32.totalorder %s32, 1
      %p179 = por %p177, %p178
      %p180 = scmp.ne.s32.totalorder %s169, %s170
      %p181 = scmp.eq.s32.totalorder %s32, 0
      %p182 = por %p180, %p181
      %p183 = scmp.ne.s32.totalorder %s169, %s170
      %p184 = scmp.eq.s32.totalorder %s33, 1
      %p185 = por %p183, %p184
      %p187 = scmp.ne.s32.totalorder %s170, %s186
      %p188 = scmp.eq.s32.totalorder %s33, 0
      %p189 = por %p187, %p188
      %s190 = ssub.s32 %s34, %s46
      %s191 = ssub.s32 %s35, %s42
      %s192 = sor.u32 %s190, %s191
      %p193 = scmp.eq.s32.totalorder %s192, 0
      %s195 = sadd.s32 %s194, 1
      %s196 = scalar_select %p193, %s194, %s195
      %p199 = pneg %p193
      %p200 = scmp.eq.s32.totalorder %s27, 1
      %p201 = por %p199, %p200
      %p202 = scmp.ne.s32.totalorder %s194, %s197
      %p203 = scmp.eq.s32.totalorder %s27, 0
      %p204 = por %p202, %p203
      %p205 = scmp.ne.s32.totalorder %s194, %s197
      %p206 = scmp.eq.s32.totalorder %s32, 1
      %p207 = por %p205, %p206
      %p208 = scmp.ne.s32.totalorder %s197, %s198
      %p209 = scmp.eq.s32.totalorder %s32, 0
      %p210 = por %p208, %p209
      %p211 = scmp.ne.s32.totalorder %s197, %s198
      %p212 = scmp.eq.s32.totalorder %s33, 1
      %p213 = por %p211, %p212
      %p215 = scmp.ne.s32.totalorder %s198, %s214
      %p216 = scmp.eq.s32.totalorder %s33, 0
      %p217 = por %p215, %p216
      %s218 = ssub.s32 %s34, %s46
      %s219 = ssub.s32 %s35, %s42
      %s220 = sor.u32 %s218, %s219
      %p221 = scmp.eq.s32.totalorder %s220, 0
      %s223 = sadd.s32 %s222, 1
      %s224 = scalar_select %p221, %s222, %s223
      %p227 = pneg %p221
      %p228 = scmp.eq.s32.totalorder %s27, 1
      %p229 = por %p227, %p228
      %p230 = scmp.ne.s32.totalorder %s222, %s225
      %p231 = scmp.eq.s32.totalorder %s27, 0
      %p232 = por %p230, %p231
      %p233 = scmp.ne.s32.totalorder %s222, %s225
      %p234 = scmp.eq.s32.totalorder %s32, 1
      %p235 = por %p233, %p234
      %p236 = scmp.ne.s32.totalorder %s225, %s226
      %p237 = scmp.eq.s32.totalorder %s32, 0
      %p238 = por %p236, %p237
      %p239 = scmp.ne.s32.totalorder %s225, %s226
      %p240 = scmp.eq.s32.totalorder %s33, 1
      %p241 = por %p239, %p240
      %p243 = scmp.ne.s32.totalorder %s226, %s242
      %p244 = scmp.eq.s32.totalorder %s33, 0
      %p245 = por %p243, %p244
      %p246 = scmp.le.s32.totalorder 1, %s27
      %p247 = scmp.lt.s32.totalorder %s27, 3
      %p248 = pnand %p246, %p247
      %p249 = pneg %p248
      // Predicated region
      $region9: #{tpu_custom_call.1} parent=5 // pred_check
        _
      $region10: #{tpu_custom_call.1} parent=5 // pred_check_branch
        %251 = sbr.rel (%p248) target = $region12
      $region11: #{tpu_custom_call.1} parent=5 // pred_region
        %s252 = ssub.s32 %s27, 1
        // Predicated region
        $region13: #{tpu_custom_call.1} parent=11 // pred_check
          %p253 = pneg %p60
        $region14: #{tpu_custom_call.1} parent=11 // pred_check_branch
          %255 = sbr.rel (%p253) target = $region16
        $region15: #{tpu_custom_call.1} parent=11 // pred_region
          _
        $region16: #{tpu_custom_call.1} parent=11 // pred_fallthru
          _
        // Predicated region
        $region17: #{tpu_custom_call.1} parent=11 // pred_check
          %p256 = pneg %p109
        $region18: #{tpu_custom_call.1} parent=11 // pred_check_branch
          %258 = sbr.rel (%p256) target = $region20
        $region19: #{tpu_custom_call.1} parent=11 // pred_region
          _
        $region20: #{tpu_custom_call.1} parent=11 // pred_fallthru
          _
        // Predicated region
        $region21: #{tpu_custom_call.1} parent=11 // pred_check
          %p259 = pneg %p130
        $region22: #{tpu_custom_call.1} parent=11 // pred_check_branch
          %261 = sbr.rel (%p259) target = $region24
        $region23: #{tpu_custom_call.1} parent=11 // pred_region
          _
        $region24: #{tpu_custom_call.1} parent=11 // pred_fallthru
          _
      $region12: #{tpu_custom_call.1} parent=5 // pred_fallthru
        _
      %p262 = scmp.lt.s32.totalorder %s27, 2
      // Predicated region
      $region25: #{tpu_custom_call.1} parent=5 // pred_check
        %p263 = pneg %p262
      $region26: #{tpu_custom_call.1} parent=5 // pred_check_branch
        %265 = sbr.rel (%p263) target = $region28
      $region27: #{tpu_custom_call.1} parent=5 // pred_region
        // Predicated region
        $region29: #{tpu_custom_call.1} parent=27 // pred_check
          %p266 = pneg %p82
        $region30: #{tpu_custom_call.1} parent=27 // pred_check_branch
          %268 = sbr.rel (%p266) target = $region32
        $region31: #{tpu_custom_call.1} parent=27 // pred_region
          %s269 = sand.u32 %s72, 1
          %s270 = scalar_lea.sflag [#allocation4], %s269
          %s271 = sand.u32 %s72, 1
          %s272 = smul.addr %s271, 128
          %s273 = scalar_lea.vmem [#allocation3], %s272
          %s274 = smul.u32 2, %s35
          %s276 = ssub.s32 2048, 2048
          %277 = vsyncadd %s270, %s276
          %s278 = smul.addr %s34, 16
          %s279 = sadd.s32 %s274, %s278
          %s280 = smul.addr %s279, 128
          %s281 = scalar_lea.hbm %s1, %s280
          %s282 = sshll.u32 %s273, 4
          %s283 = int_to_ptr.vmem [resolvable:$true] %s282
          %288 = dma.hbm_to_vmem [thread:$0]  %s281, 2048, %s283, %s270, 256, 256, 16
        $region32: #{tpu_custom_call.1} parent=27 // pred_fallthru
          _
        // Predicated region
        $region33: #{tpu_custom_call.1} parent=27 // pred_check
          %p289 = pneg %p150
        $region34: #{tpu_custom_call.1} parent=27 // pred_check_branch
          %291 = sbr.rel (%p289) target = $region36
        $region35: #{tpu_custom_call.1} parent=27 // pred_region
          %p292 = scmp.lt.s32.totalorder %s34, 1
          %s293 = scalar_select %p292, %s34, 1
          %s294 = smul.addr %s293, 2
          %s295 = smul.addr %s294, 4
          %s296 = scalar_lea.vmem %s4, %s295
        $region36: #{tpu_custom_call.1} parent=27 // pred_fallthru
          _
        // Predicated region
        $region37: #{tpu_custom_call.1} parent=27 // pred_check
          %p297 = pneg %p176
        $region38: #{tpu_custom_call.1} parent=27 // pred_check_branch
          %299 = sbr.rel (%p297) target = $region40
        $region39: #{tpu_custom_call.1} parent=27 // pred_region
          %s300 = sand.u32 %s166, 1
          %s301 = scalar_lea.sflag [#allocation7], %s300
          %s302 = sand.u32 %s166, 1
          %s303 = smul.addr %s302, 64
          %s304 = scalar_lea.vmem [#allocation6], %s303
          %s306 = ssub.s32 1024, 1024
          %307 = vsyncadd %s301, %s306
          %s308 = smul.addr %s34, 16
          %s309 = smul.addr %s308, 64
          %s310 = scalar_lea.hbm %s5, %s309
          %s311 = sshll.u32 %s304, 4
          %s312 = int_to_ptr.vmem [resolvable:$true] %s311
          %317 = dma.hbm_to_vmem [thread:$0]  %s310, 1024, %s312, %s301, 128, 128, 8
        $region40: #{tpu_custom_call.1} parent=27 // pred_fallthru
          _
      $region28: #{tpu_custom_call.1} parent=5 // pred_fallthru
        _
      %p318 = scmp.le.s32.totalorder 1, %s27
      %p319 = scmp.lt.s32.totalorder %s27, 3
      %p320 = pnand %p318, %p319
      %p321 = pneg %p320
      // Predicated region
      $region41: #{tpu_custom_call.1} parent=5 // pred_check
        _
      $region42: #{tpu_custom_call.1} parent=5 // pred_check_branch
        %323 = sbr.rel (%p320) target = $region44
      $region43: #{tpu_custom_call.1} parent=5 // pred_region
        %s324 = ssub.s32 %s27, 1
        %s325 = sand.u32 %s75, 1
        %s326 = scalar_lea.sflag [#allocation4], %s325
        %s327 = sand.u32 %s75, 1
        %s328 = smul.addr %s327, 128
        %s329 = scalar_lea.vmem [#allocation3], %s328
        // Predicated region
        $region45: #{tpu_custom_call.1} parent=43 // pred_check
          %p330 = pneg %p88
        $region46: #{tpu_custom_call.1} parent=43 // pred_check_branch
          %332 = sbr.rel (%p330) target = $region48
        $region47: #{tpu_custom_call.1} parent=43 // pred_region
          %333 = dma.done %s326, 2048
        $region48: #{tpu_custom_call.1} parent=43 // pred_fallthru
          _
        %s334 = sand.u32 %s169, 1
        %s335 = scalar_lea.sflag [#allocation7], %s334
        %s336 = sand.u32 %s169, 1
        %s337 = smul.addr %s336, 64
        %s338 = scalar_lea.vmem [#allocation6], %s337
        // Predicated region
        $region49: #{tpu_custom_call.1} parent=43 // pred_check
          %p339 = pneg %p182
        $region50: #{tpu_custom_call.1} parent=43 // pred_check_branch
          %341 = sbr.rel (%p339) target = $region52
        $region51: #{tpu_custom_call.1} parent=43 // pred_region
          %342 = dma.done %s335, 1024
        $region52: #{tpu_custom_call.1} parent=43 // pred_fallthru
          _
        %p343 = pneg %p60
        %p344 = pneg %p57
        %s345 = sand.u32 %s75, 1
        %s346 = scalar_lea.sflag [#allocation4], %s345
        %s347 = sand.u32 %s75, 1
        %s348 = smul.addr %s347, 128
        %s349 = scalar_lea.vmem [#allocation3], %s348
        %p350 = pneg %p88
        %p351 = pneg %p85
        %p352 = pneg %p109
        %p353 = pneg %p106
        %p354 = pneg %p130
        %p355 = pneg %p127
        %p356 = scmp.lt.s32.totalorder %s36, 1
        %s357 = scalar_select %p356, %s36, 1
        %s358 = smul.addr %s357, 2
        %s359 = smul.addr %s358, 4
        %s360 = scalar_lea.vmem %s4, %s359
        %p361 = pneg %p156
        %p362 = pneg %p153
        %s363 = sand.u32 %s169, 1
        %s364 = scalar_lea.sflag [#allocation7], %s363
        %s365 = sand.u32 %s169, 1
        %s366 = smul.addr %s365, 64
        %s367 = scalar_lea.vmem [#allocation6], %s366
        %p368 = pneg %p182
        %p369 = pneg %p179
        %p370 = pneg %p210
        %p371 = pneg %p207
        %s372 = sand.u32 %s197, 1
        %s373 = scalar_lea.sflag [#allocation5], %s372
        %s374 = sand.u32 %s197, 1
        %s375 = smul.addr %s374, 128
        %s376 = scalar_lea.vmem [#allocation8], %s375
        %p377 = pneg %p238
        %p378 = pneg %p235
        %s379 = sand.u32 %s225, 1
        %s380 = scalar_lea.sflag [#allocation10], %s379
        %s381 = sand.u32 %s225, 1
        %s382 = smul.addr %s381, 512
        %s383 = scalar_lea.vmem [#allocation9], %s382
        %s384 = smul.u32 2, %s37
        %p385 = scmp.lt.s32.totalorder %s36, 1
        %s386 = scalar_select %p385, %s36, 1
        %s387 = smul.addr %s386, 2
        %s388 = smul.addr %s387, 4
        %s389 = scalar_lea.vmem %s4, %s388
        %s390 = smul.u32 2, %s37
        %s391 = smul.u32 32, %s37
        %v393 = vld [vmem:[%s329] sm:$0xff]
        %v394 = vld [vmem:[%s329 + $0x8] sm:$0xff]
        %v395 = vld [vmem:[%s329 + $0x10] sm:$0xff]
        %v396 = vld [vmem:[%s329 + $0x18] sm:$0xff]
        %v397 = vld [vmem:[%s329 + $0x20] sm:$0xff]
        %v398 = vld [vmem:[%s329 + $0x28] sm:$0xff]
        %v399 = vld [vmem:[%s329 + $0x30] sm:$0xff]
        %v400 = vld [vmem:[%s329 + $0x38] sm:$0xff]
        %v401 = vld [vmem:[%s329 + $0x40] sm:$0xff]
        %v402 = vld [vmem:[%s329 + $0x48] sm:$0xff]
        %v403 = vld [vmem:[%s329 + $0x50] sm:$0xff]
        %v404 = vld [vmem:[%s329 + $0x58] sm:$0xff]
        %v405 = vld [vmem:[%s329 + $0x60] sm:$0xff]
        %v406 = vld [vmem:[%s329 + $0x68] sm:$0xff]
        %v407 = vld [vmem:[%s329 + $0x70] sm:$0xff]
        %v408 = vld [vmem:[%s329 + $0x78] sm:$0xff]
        %v409 = vld [vmem:[%s2] sm:$0xf]
        %v410 = vld [vmem:[%s2 + $0x4] sm:$0xf]
        %v411 = vld [vmem:[%s2 + $0x8] sm:$0xf]
        %v412 = vld [vmem:[%s2 + $0xc] sm:$0xf]
        %v413 = vld [vmem:[%s2 + $0x10] sm:$0xf]
        %v414 = vld [vmem:[%s2 + $0x14] sm:$0xf]
        %v415 = vld [vmem:[%s2 + $0x18] sm:$0xf]
        %v416 = vld [vmem:[%s2 + $0x1c] sm:$0xf]
        %v417 = vpack.c.bf16 %v395, %v393
        %v418 = vpack.c.bf16 %v396, %v394
        %v419 = vpack.c.bf16 %v399, %v397
        %v420 = vpack.c.bf16 %v400, %v398
        %v421 = vpack.c.bf16 %v403, %v401
        %v422 = vpack.c.bf16 %v404, %v402
        %v423 = vpack.c.bf16 %v407, %v405
        %v424 = vpack.c.bf16 %v408, %v406
        %v425 = vld [vmem:[%s3] sm:$0xff]
        %427 = vset.pattern.permute.xlu0 0
        %428 = vperm.xlu0 %427, %v425
        %v429 = vpop.permute.xlu0 %428
        %v439 = vunpack.c.l.b16 %v409
        %v440 = vunpack.c.l.b16 %v410
        %v441 = vunpack.c.l.b16 %v411
        %v442 = vunpack.c.l.b16 %v412
        %v443 = vunpack.c.l.b16 %v413
        %v444 = vunpack.c.l.b16 %v414
        %v445 = vunpack.c.l.b16 %v415
        %v446 = vunpack.c.l.b16 %v416
        %v447 = vpack.c.b16 %v440, %v439
        %v448 = vpack.c.b16 %v442, %v441
        %v449 = vpack.c.b16 %v444, %v443
        %v450 = vpack.c.b16 %v446, %v445
        %455 = vxpose.xlu0.c.b16.start [1/8] %v447, 128
        %456 = vxpose.xlu0.c.b16.cont [2/8] %v448, 128
        %457 = vxpose.xlu0.c.b16.cont [3/8] %v449, 128
        %458 = vxpose.xlu0.c.b16.cont [4/8] %v450, 128
        %459 = vxpose.xlu0.c.b16.cont [5/8] 0, 128
        %460 = vxpose.xlu0.c.b16.cont [6/8] 0, 128
        %461 = vxpose.xlu0.c.b16.cont [7/8] 0, 128
        %462 = vxpose.xlu0.c.b16.end [8/8] 0, 128
        %v463 = vpop.trf.xlu0
        %v464 = vpop.trf.xlu0
        %v465 = vpop.trf.xlu0
        %v466 = vpop.trf.xlu0
        %v467 = vpop.trf.xlu0
        %v468 = vpop.trf.xlu0
        %v469 = vpop.trf.xlu0
        %v470 = vpop.trf.xlu0
        %vm471 = vcmask 523264
        %v473 = vsel %vm471, %v463, 0
        %475 = vmatprep.subr.bf16.mxu0 0
        %476 = vmatpush1.bf16.msra.mxu0 0
        %477 = vmatprep.subr.bf16.mxu0 0
        %478 = vmatpush1.bf16.msra.mxu0 0
        %479 = vmatprep.subr.bf16.mxu0 0
        %480 = vmatpush1.bf16.msra.mxu0 0
        %481 = vmatprep.subr.bf16.mxu0 0
        %482 = vmatpush1.bf16.msra.mxu0 0
        %483 = vmatprep.subr.bf16.mxu0 %v424
        %484 = vmatpush1.bf16.msra.mxu0 %v423
        %485 = vmatprep.subr.bf16.mxu0 %v422
        %486 = vmatpush1.bf16.msra.mxu0 %v421
        %487 = vmatprep.subr.bf16.mxu0 %v420
        %488 = vmatpush1.bf16.msra.mxu0 %v419
        %489 = vmatprep.subr.bf16.mxu0 %v418
        %490 = vmatpush1.bf16.msra.mxu0 %v417
        %491 = vmatprep.subr.bf16.mxu0 0
        %492 = vmatpush2.bf16.msra.mxu0 0
        %493 = vmatprep.subr.bf16.mxu0 0
        %494 = vmatpush2.bf16.msra.mxu0 0
        %495 = vmatprep.subr.bf16.mxu0 0
        %496 = vmatpush2.bf16.msra.mxu0 0
        %497 = vmatprep.subr.bf16.mxu0 0
        %498 = vmatpush2.bf16.msra.mxu0 0
        %499 = vmatprep.subr.bf16.mxu0 0
        %500 = vmatpush2.bf16.msra.mxu0 0
        %501 = vmatprep.subr.bf16.mxu0 0
        %502 = vmatpush2.bf16.msra.mxu0 0
        %503 = vmatprep.subr.bf16.mxu0 0
        %504 = vmatpush2.bf16.msra.mxu0 0
        %505 = vmatprep.subr.bf16.mxu0 0
        %506 = vmatpush2.bf16.msra.mxu0 0
        %507 = vmatprep.mubr.bf16.mxu0 0
        %508 = vmatmul.mubr.bf16.gmra.mxu0 %v473
        %v509 = vpop.f32.mrf.mxu0
        %v510 = vadd.f32 %v429, %v509
        %v511 = vpop.f32.mrf.mxu0
        %v512 = vadd.f32 %v429, %v511
        %v513 = vpop.f32.mrf.mxu0
        %v514 = vpop.f32.mrf.mxu0
        %515 = vdwg.mxu0
        %v516 = vpack.c.bf16 %v510, %v510
        %v517 = vpack.c.bf16 %v512, %v512
        %v518 = vld [vmem:[%s389] sm:$0xff]
        %519 = vxpose.xlu0.c.b16.start [1/8] %v516, 128
        %520 = vxpose.xlu0.c.b16.cont [2/8] 0, 128
        %521 = vxpose.xlu0.c.b16.cont [3/8] 0, 128
        %522 = vxpose.xlu0.c.b16.cont [4/8] 0, 128
        %523 = vxpose.xlu0.c.b16.cont [5/8] 0, 128
        %524 = vxpose.xlu0.c.b16.cont [6/8] 0, 128
        %525 = vxpose.xlu0.c.b16.cont [7/8] 0, 128
        %526 = vxpose.xlu0.c.b16.end [8/8] 0, 128
        %v527 = vpop.trf.xlu0
        %v528 = vpop.trf.xlu0
        %v529 = vpop.trf.xlu0
        %v530 = vpop.trf.xlu0
        %v531 = vpop.trf.xlu0
        %v532 = vpop.trf.xlu0
        %v533 = vpop.trf.xlu0
        %v534 = vpop.trf.xlu0
        %535 = vxpose.xlu0.c.b16.start [1/8] %v517, 128
        %536 = vxpose.xlu0.c.b16.cont [2/8] 0, 128
        %537 = vxpose.xlu0.c.b16.cont [3/8] 0, 128
        %538 = vxpose.xlu0.c.b16.cont [4/8] 0, 128
        %539 = vxpose.xlu0.c.b16.cont [5/8] 0, 128
        %540 = vxpose.xlu0.c.b16.cont [6/8] 0, 128
        %541 = vxpose.xlu0.c.b16.cont [7/8] 0, 128
        %542 = vxpose.xlu0.c.b16.end [8/8] 0, 128
        %v543 = vpop.trf.xlu0
        %v544 = vpop.trf.xlu0
        %v545 = vpop.trf.xlu0
        %v546 = vpop.trf.xlu0
        %v547 = vpop.trf.xlu0
        %v548 = vpop.trf.xlu0
        %v549 = vpop.trf.xlu0
        %v550 = vpop.trf.xlu0
        %v552 = vunpack.c.l.b16 %v518
        %v553 = vunpack.c.h.b16 %v518
        %v554 = vpack.c.b16 %v552, %v552
        %v555 = vpack.c.b16 %v553, %v553
        %vm556 = vcmask 64512
        %v558 = vsel %vm556, %v527, 0
        %v561 = vsel %vm556, %v528, 0
        %v564 = vsel %vm556, %v529, 0
        %v567 = vsel %vm556, %v530, 0
        %v570 = vsel %vm556, %v531, 0
        %v573 = vsel %vm556, %v532, 0
        %v576 = vsel %vm556, %v533, 0
        %v579 = vsel %vm556, %v534, 0
        %v582 = vsel %vm556, %v543, 0
        %v585 = vsel %vm556, %v544, 0
        %v588 = vsel %vm556, %v545, 0
        %v591 = vsel %vm556, %v546, 0
        %v594 = vsel %vm556, %v547, 0
        %v597 = vsel %vm556, %v548, 0
        %v600 = vsel %vm556, %v549, 0
        %v603 = vsel %vm556, %v550, 0
        %vm605 = vcmask 1043456
        %v607 = vsel %vm605, %v554, 0
        %v610 = vsel %vm605, %v555, 0
        %612 = vmatprep.subr.bf16.mxu0 0
        %613 = vmatpush1.bf16.msra.mxu0 0
        %614 = vmatprep.subr.bf16.mxu0 0
        %615 = vmatpush1.bf16.msra.mxu0 0
        %616 = vmatprep.subr.bf16.mxu0 0
        %617 = vmatpush1.bf16.msra.mxu0 0
        %618 = vmatprep.subr.bf16.mxu0 0
        %619 = vmatpush1.bf16.msra.mxu0 0
        %620 = vmatprep.subr.bf16.mxu0 0
        %621 = vmatpush1.bf16.msra.mxu0 0
        %622 = vmatprep.subr.bf16.mxu0 0
        %623 = vmatpush1.bf16.msra.mxu0 0
        %624 = vmatprep.subr.bf16.mxu0 0
        %625 = vmatpush1.bf16.msra.mxu0 0
        %626 = vmatprep.subr.bf16.mxu0 %v610
        %627 = vmatpush1.bf16.msra.mxu0 %v607
        %628 = vmatprep.subr.bf16.mxu0 0
        %629 = vmatpush2.bf16.msra.mxu0 0
        %630 = vmatprep.subr.bf16.mxu0 0
        %631 = vmatpush2.bf16.msra.mxu0 0
        %632 = vmatprep.subr.bf16.mxu0 0
        %633 = vmatpush2.bf16.msra.mxu0 0
        %634 = vmatprep.subr.bf16.mxu0 0
        %635 = vmatpush2.bf16.msra.mxu0 0
        %636 = vmatprep.subr.bf16.mxu0 0
        %637 = vmatpush2.bf16.msra.mxu0 0
        %638 = vmatprep.subr.bf16.mxu0 0
        %639 = vmatpush2.bf16.msra.mxu0 0
        %640 = vmatprep.subr.bf16.mxu0 0
        %641 = vmatpush2.bf16.msra.mxu0 0
        %642 = vmatprep.subr.bf16.mxu0 0
        %643 = vmatpush2.bf16.msra.mxu0 0
        %644 = vmatprep.mubr.bf16.mxu0 0
        %645 = vmatmul.mubr.bf16.gmra.mxu0 %v558
        %v646 = vpop.f32.mrf.mxu0
        %v647 = vadd.f32 0.0, %v646
        %v648 = vpop.f32.mrf.mxu0
        %v649 = vadd.f32 0.0, %v648
        %v650 = vpop.f32.mrf.mxu0
        %v651 = vadd.f32 0.0, %v650
        %v652 = vpop.f32.mrf.mxu0
        %v653 = vadd.f32 0.0, %v652
        %654 = vmatprep.mubr.bf16.mxu0 0
        %655 = vmatmul.mubr.bf16.gmra.mxu0 %v561
        %v656 = vpop.f32.mrf.mxu0
        %v657 = vadd.f32 0.0, %v656
        %v658 = vpop.f32.mrf.mxu0
        %v659 = vadd.f32 0.0, %v658
        %v660 = vpop.f32.mrf.mxu0
        %v661 = vadd.f32 0.0, %v660
        %v662 = vpop.f32.mrf.mxu0
        %v663 = vadd.f32 0.0, %v662
        %664 = vmatprep.mubr.bf16.mxu0 0
        %665 = vmatmul.mubr.bf16.gmra.mxu0 %v564
        %v666 = vpop.f32.mrf.mxu0
        %v667 = vadd.f32 0.0, %v666
        %v668 = vpop.f32.mrf.mxu0
        %v669 = vadd.f32 0.0, %v668
        %v670 = vpop.f32.mrf.mxu0
        %v671 = vadd.f32 0.0, %v670
        %v672 = vpop.f32.mrf.mxu0
        %v673 = vadd.f32 0.0, %v672
        %674 = vmatprep.mubr.bf16.mxu0 0
        %675 = vmatmul.mubr.bf16.gmra.mxu0 %v567
        %v676 = vpop.f32.mrf.mxu0
        %v677 = vadd.f32 0.0, %v676
        %v678 = vpop.f32.mrf.mxu0
        %v679 = vadd.f32 0.0, %v678
        %v680 = vpop.f32.mrf.mxu0
        %v681 = vadd.f32 0.0, %v680
        %v682 = vpop.f32.mrf.mxu0
        %v683 = vadd.f32 0.0, %v682
        %684 = vmatprep.mubr.bf16.mxu0 0
        %685 = vmatmul.mubr.bf16.gmra.mxu0 %v570
        %v686 = vpop.f32.mrf.mxu0
        %v687 = vadd.f32 0.0, %v686
        %v688 = vpop.f32.mrf.mxu0
        %v689 = vadd.f32 0.0, %v688
        %v690 = vpop.f32.mrf.mxu0
        %v691 = vadd.f32 0.0, %v690
        %v692 = vpop.f32.mrf.mxu0
        %v693 = vadd.f32 0.0, %v692
        %694 = vmatprep.mubr.bf16.mxu0 0
        %695 = vmatmul.mubr.bf16.gmra.mxu0 %v573
        %v696 = vpop.f32.mrf.mxu0
        %v697 = vadd.f32 0.0, %v696
        %v698 = vpop.f32.mrf.mxu0
        %v699 = vadd.f32 0.0, %v698
        %v700 = vpop.f32.mrf.mxu0
        %v701 = vadd.f32 0.0, %v700
        %v702 = vpop.f32.mrf.mxu0
        %v703 = vadd.f32 0.0, %v702
        %704 = vmatprep.mubr.bf16.mxu0 0
        %705 = vmatmul.mubr.bf16.gmra.mxu0 %v576
        %v706 = vpop.f32.mrf.mxu0
        %v707 = vadd.f32 0.0, %v706
        %v708 = vpop.f32.mrf.mxu0
        %v709 = vadd.f32 0.0, %v708
        %v710 = vpop.f32.mrf.mxu0
        %v711 = vadd.f32 0.0, %v710
        %v712 = vpop.f32.mrf.mxu0
        %v713 = vadd.f32 0.0, %v712
        %714 = vmatprep.mubr.bf16.mxu0 0
        %715 = vmatmul.mubr.bf16.gmra.mxu0 %v579
        %v716 = vpop.f32.mrf.mxu0
        %v717 = vadd.f32 0.0, %v716
        %v718 = vpop.f32.mrf.mxu0
        %v719 = vadd.f32 0.0, %v718
        %v720 = vpop.f32.mrf.mxu0
        %v721 = vadd.f32 0.0, %v720
        %v722 = vpop.f32.mrf.mxu0
        %v723 = vadd.f32 0.0, %v722
        %724 = vmatprep.mubr.bf16.mxu0 0
        %725 = vmatmul.mubr.bf16.gmra.mxu0 %v582
        %v726 = vpop.f32.mrf.mxu0
        %v727 = vadd.f32 0.0, %v726
        %v728 = vpop.f32.mrf.mxu0
        %v729 = vadd.f32 0.0, %v728
        %v730 = vpop.f32.mrf.mxu0
        %v731 = vadd.f32 0.0, %v730
        %v732 = vpop.f32.mrf.mxu0
        %v733 = vadd.f32 0.0, %v732
        %734 = vmatprep.mubr.bf16.mxu0 0
        %735 = vmatmul.mubr.bf16.gmra.mxu0 %v585
        %v736 = vpop.f32.mrf.mxu0
        %v737 = vadd.f32 0.0, %v736
        %v738 = vpop.f32.mrf.mxu0
        %v739 = vadd.f32 0.0, %v738
        %v740 = vpop.f32.mrf.mxu0
        %v741 = vadd.f32 0.0, %v740
        %v742 = vpop.f32.mrf.mxu0
        %v743 = vadd.f32 0.0, %v742
        %744 = vmatprep.mubr.bf16.mxu0 0
        %745 = vmatmul.mubr.bf16.gmra.mxu0 %v588
        %v746 = vpop.f32.mrf.mxu0
        %v747 = vadd.f32 0.0, %v746
        %v748 = vpop.f32.mrf.mxu0
        %v749 = vadd.f32 0.0, %v748
        %v750 = vpop.f32.mrf.mxu0
        %v751 = vadd.f32 0.0, %v750
        %v752 = vpop.f32.mrf.mxu0
        %v753 = vadd.f32 0.0, %v752
        %754 = vmatprep.mubr.bf16.mxu0 0
        %755 = vmatmul.mubr.bf16.gmra.mxu0 %v591
        %v756 = vpop.f32.mrf.mxu0
        %v757 = vadd.f32 0.0, %v756
        %v758 = vpop.f32.mrf.mxu0
        %v759 = vadd.f32 0.0, %v758
        %v760 = vpop.f32.mrf.mxu0
        %v761 = vadd.f32 0.0, %v760
        %v762 = vpop.f32.mrf.mxu0
        %v763 = vadd.f32 0.0, %v762
        %764 = vmatprep.mubr.bf16.mxu0 0
        %765 = vmatmul.mubr.bf16.gmra.mxu0 %v594
        %v766 = vpop.f32.mrf.mxu0
        %v767 = vadd.f32 0.0, %v766
        %v768 = vpop.f32.mrf.mxu0
        %v769 = vadd.f32 0.0, %v768
        %v770 = vpop.f32.mrf.mxu0
        %v771 = vadd.f32 0.0, %v770
        %v772 = vpop.f32.mrf.mxu0
        %v773 = vadd.f32 0.0, %v772
        %774 = vmatprep.mubr.bf16.mxu0 0
        %775 = vmatmul.mubr.bf16.gmra.mxu0 %v597
        %v776 = vpop.f32.mrf.mxu0
        %v777 = vadd.f32 0.0, %v776
        %v778 = vpop.f32.mrf.mxu0
        %v779 = vadd.f32 0.0, %v778
        %v780 = vpop.f32.mrf.mxu0
        %v781 = vadd.f32 0.0, %v780
        %v782 = vpop.f32.mrf.mxu0
        %v783 = vadd.f32 0.0, %v782
        %784 = vmatprep.mubr.bf16.mxu0 0
        %785 = vmatmul.mubr.bf16.gmra.mxu0 %v600
        %v786 = vpop.f32.mrf.mxu0
        %v787 = vadd.f32 0.0, %v786
        %v788 = vpop.f32.mrf.mxu0
        %v789 = vadd.f32 0.0, %v788
        %v790 = vpop.f32.mrf.mxu0
        %v791 = vadd.f32 0.0, %v790
        %v792 = vpop.f32.mrf.mxu0
        %v793 = vadd.f32 0.0, %v792
        %794 = vmatprep.mubr.bf16.mxu0 0
        %795 = vmatmul.mubr.bf16.gmra.mxu0 %v603
        %v796 = vpop.f32.mrf.mxu0
        %v797 = vadd.f32 0.0, %v796
        %v798 = vpop.f32.mrf.mxu0
        %v799 = vadd.f32 0.0, %v798
        %v800 = vpop.f32.mrf.mxu0
        %v801 = vadd.f32 0.0, %v800
        %v802 = vpop.f32.mrf.mxu0
        %v803 = vadd.f32 0.0, %v802
        %804 = vdwg.mxu0
        %v805 = vmax.f32 %v647, %v649
        %806 = vmax.xlane.f32.xlu0 %v805
        %v807 = vpop.xlane.xlu0 %806
        %v808 = vmax.f32 %v651, %v653
        %809 = vmax.xlane.f32.xlu0 %v808
        %v810 = vpop.xlane.xlu0 %809
        %v811 = vmax.f32 %v657, %v659
        %812 = vmax.xlane.f32.xlu0 %v811
        %v813 = vpop.xlane.xlu0 %812
        %v814 = vmax.f32 %v661, %v663
        %815 = vmax.xlane.f32.xlu0 %v814
        %v816 = vpop.xlane.xlu0 %815
        %v817 = vmax.f32 %v667, %v669
        %818 = vmax.xlane.f32.xlu0 %v817
        %v819 = vpop.xlane.xlu0 %818
        %v820 = vmax.f32 %v671, %v673
        %821 = vmax.xlane.f32.xlu0 %v820
        %v822 = vpop.xlane.xlu0 %821
        %v823 = vmax.f32 %v677, %v679
        %824 = vmax.xlane.f32.xlu0 %v823
        %v825 = vpop.xlane.xlu0 %824
        %v826 = vmax.f32 %v681, %v683
        %827 = vmax.xlane.f32.xlu0 %v826
        %v828 = vpop.xlane.xlu0 %827
        %v829 = vmax.f32 %v687, %v689
        %830 = vmax.xlane.f32.xlu0 %v829
        %v831 = vpop.xlane.xlu0 %830
        %v832 = vmax.f32 %v691, %v693
        %833 = vmax.xlane.f32.xlu0 %v832
        %v834 = vpop.xlane.xlu0 %833
        %v835 = vmax.f32 %v697, %v699
        %836 = vmax.xlane.f32.xlu0 %v835
        %v837 = vpop.xlane.xlu0 %836
        %v838 = vmax.f32 %v701, %v703
        %839 = vmax.xlane.f32.xlu0 %v838
        %v840 = vpop.xlane.xlu0 %839
        %v841 = vmax.f32 %v707, %v709
        %842 = vmax.xlane.f32.xlu0 %v841
        %v843 = vpop.xlane.xlu0 %842
        %v844 = vmax.f32 %v711, %v713
        %845 = vmax.xlane.f32.xlu0 %v844
        %v846 = vpop.xlane.xlu0 %845
        %v847 = vmax.f32 %v717, %v719
        %848 = vmax.xlane.f32.xlu0 %v847
        %v849 = vpop.xlane.xlu0 %848
        %v850 = vmax.f32 %v721, %v723
        %851 = vmax.xlane.f32.xlu0 %v850
        %v852 = vpop.xlane.xlu0 %851
        %v853 = vmax.f32 %v727, %v729
        %854 = vmax.xlane.f32.xlu0 %v853
        %v855 = vpop.xlane.xlu0 %854
        %v856 = vmax.f32 %v731, %v733
        %857 = vmax.xlane.f32.xlu0 %v856
        %v858 = vpop.xlane.xlu0 %857
        %v859 = vmax.f32 %v737, %v739
        %860 = vmax.xlane.f32.xlu0 %v859
        %v861 = vpop.xlane.xlu0 %860
        %v862 = vmax.f32 %v741, %v743
        %863 = vmax.xlane.f32.xlu0 %v862
        %v864 = vpop.xlane.xlu0 %863
        %v865 = vmax.f32 %v747, %v749
        %866 = vmax.xlane.f32.xlu0 %v865
        %v867 = vpop.xlane.xlu0 %866
        %v868 = vmax.f32 %v751, %v753
        %869 = vmax.xlane.f32.xlu0 %v868
        %v870 = vpop.xlane.xlu0 %869
        %v871 = vmax.f32 %v757, %v759
        %872 = vmax.xlane.f32.xlu0 %v871
        %v873 = vpop.xlane.xlu0 %872
        %v874 = vmax.f32 %v761, %v763
        %875 = vmax.xlane.f32.xlu0 %v874
        %v876 = vpop.xlane.xlu0 %875
        %v877 = vmax.f32 %v767, %v769
        %878 = vmax.xlane.f32.xlu0 %v877
        %v879 = vpop.xlane.xlu0 %878
        %v880 = vmax.f32 %v771, %v773
        %881 = vmax.xlane.f32.xlu0 %v880
        %v882 = vpop.xlane.xlu0 %881
        %v883 = vmax.f32 %v777, %v779
        %884 = vmax.xlane.f32.xlu0 %v883
        %v885 = vpop.xlane.xlu0 %884
        %v886 = vmax.f32 %v781, %v783
        %887 = vmax.xlane.f32.xlu0 %v886
        %v888 = vpop.xlane.xlu0 %887
        %v889 = vmax.f32 %v787, %v789
        %890 = vmax.xlane.f32.xlu0 %v889
        %v891 = vpop.xlane.xlu0 %890
        %v892 = vmax.f32 %v791, %v793
        %893 = vmax.xlane.f32.xlu0 %v892
        %v894 = vpop.xlane.xlu0 %893
        %v895 = vmax.f32 %v797, %v799
        %896 = vmax.xlane.f32.xlu0 %v895
        %v897 = vpop.xlane.xlu0 %896
        %v898 = vmax.f32 %v801, %v803
        %899 = vmax.xlane.f32.xlu0 %v898
        %v900 = vpop.xlane.xlu0 %899
        %v901 = vsub.f32 %v647, %v807
        %v902 = vsub.f32 %v649, %v807
        %v903 = vsub.f32 %v651, %v810
        %v904 = vsub.f32 %v653, %v810
        %v905 = vsub.f32 %v657, %v813
        %v906 = vsub.f32 %v659, %v813
        %v907 = vsub.f32 %v661, %v816
        %v908 = vsub.f32 %v663, %v816
        %v909 = vsub.f32 %v667, %v819
        %v910 = vsub.f32 %v669, %v819
        %v911 = vsub.f32 %v671, %v822
        %v912 = vsub.f32 %v673, %v822
        %v913 = vsub.f32 %v677, %v825
        %v914 = vsub.f32 %v679, %v825
        %v915 = vsub.f32 %v681, %v828
        %v916 = vsub.f32 %v683, %v828
        %v917 = vsub.f32 %v687, %v831
        %v918 = vsub.f32 %v689, %v831
        %v919 = vsub.f32 %v691, %v834
        %v920 = vsub.f32 %v693, %v834
        %v921 = vsub.f32 %v697, %v837
        %v922 = vsub.f32 %v699, %v837
        %v923 = vsub.f32 %v701, %v840
        %v924 = vsub.f32 %v703, %v840
        %v925 = vsub.f32 %v707, %v843
        %v926 = vsub.f32 %v709, %v843
        %v927 = vsub.f32 %v711, %v846
        %v928 = vsub.f32 %v713, %v846
        %v929 = vsub.f32 %v717, %v849
        %v930 = vsub.f32 %v719, %v849
        %v931 = vsub.f32 %v721, %v852
        %v932 = vsub.f32 %v723, %v852
        %v933 = vsub.f32 %v727, %v855
        %v934 = vsub.f32 %v729, %v855
        %v935 = vsub.f32 %v731, %v858
        %v936 = vsub.f32 %v733, %v858
        %v937 = vsub.f32 %v737, %v861
        %v938 = vsub.f32 %v739, %v861
        %v939 = vsub.f32 %v741, %v864
        %v940 = vsub.f32 %v743, %v864
        %v941 = vsub.f32 %v747, %v867
        %v942 = vsub.f32 %v749, %v867
        %v943 = vsub.f32 %v751, %v870
        %v944 = vsub.f32 %v753, %v870
        %v945 = vsub.f32 %v757, %v873
        %v946 = vsub.f32 %v759, %v873
        %v947 = vsub.f32 %v761, %v876
        %v948 = vsub.f32 %v763, %v876
        %v949 = vsub.f32 %v767, %v879
        %v950 = vsub.f32 %v769, %v879
        %v951 = vsub.f32 %v771, %v882
        %v952 = vsub.f32 %v773, %v882
        %v953 = vsub.f32 %v777, %v885
        %v954 = vsub.f32 %v779, %v885
        %v955 = vsub.f32 %v781, %v888
        %v956 = vsub.f32 %v783, %v888
        %v957 = vsub.f32 %v787, %v891
        %v958 = vsub.f32 %v789, %v891
        %v959 = vsub.f32 %v791, %v894
        %v960 = vsub.f32 %v793, %v894
        %v961 = vsub.f32 %v797, %v897
        %v962 = vsub.f32 %v799, %v897
        %v963 = vsub.f32 %v801, %v900
        %v964 = vsub.f32 %v803, %v900
        %v965 = vmul.f32 %v901, 1.442695
        %v966 = vpow.pop %v965
        %v967 = vmul.f32 %v902, 1.442695
        %v968 = vpow.pop %v967
        %v969 = vmul.f32 %v903, 1.442695
        %v970 = vpow.pop %v969
        %v971 = vmul.f32 %v904, 1.442695
        %v972 = vpow.pop %v971
        %v973 = vmul.f32 %v905, 1.442695
        %v974 = vpow.pop %v973
        %v975 = vmul.f32 %v906, 1.442695
        %v976 = vpow.pop %v975
        %v977 = vmul.f32 %v907, 1.442695
        %v978 = vpow.pop %v977
        %v979 = vmul.f32 %v908, 1.442695
        %v980 = vpow.pop %v979
        %v981 = vmul.f32 %v909, 1.442695
        %v982 = vpow.pop %v981
        %v983 = vmul.f32 %v910, 1.442695
        %v984 = vpow.pop %v983
        %v985 = vmul.f32 %v911, 1.442695
        %v986 = vpow.pop %v985
        %v987 = vmul.f32 %v912, 1.442695
        %v988 = vpow.pop %v987
        %v989 = vmul.f32 %v913, 1.442695
        %v990 = vpow.pop %v989
        %v991 = vmul.f32 %v914, 1.442695
        %v992 = vpow.pop %v991
        %v993 = vmul.f32 %v915, 1.442695
        %v994 = vpow.pop %v993
        %v995 = vmul.f32 %v916, 1.442695
        %v996 = vpow.pop %v995
        %v997 = vmul.f32 %v917, 1.442695
        %v998 = vpow.pop %v997
        %v999 = vmul.f32 %v918, 1.442695
        %v1000 = vpow.pop %v999
        %v1001 = vmul.f32 %v919, 1.442695
        %v1002 = vpow.pop %v1001
        %v1003 = vmul.f32 %v920, 1.442695
        %v1004 = vpow.pop %v1003
        %v1005 = vmul.f32 %v921, 1.442695
        %v1006 = vpow.pop %v1005
        %v1007 = vmul.f32 %v922, 1.442695
        %v1008 = vpow.pop %v1007
        %v1009 = vmul.f32 %v923, 1.442695
        %v1010 = vpow.pop %v1009
        %v1011 = vmul.f32 %v924, 1.442695
        %v1012 = vpow.pop %v1011
        %v1013 = vmul.f32 %v925, 1.442695
        %v1014 = vpow.pop %v1013
        %v1015 = vmul.f32 %v926, 1.442695
        %v1016 = vpow.pop %v1015
        %v1017 = vmul.f32 %v927, 1.442695
        %v1018 = vpow.pop %v1017
        %v1019 = vmul.f32 %v928, 1.442695
        %v1020 = vpow.pop %v1019
        %v1021 = vmul.f32 %v929, 1.442695
        %v1022 = vpow.pop %v1021
        %v1023 = vmul.f32 %v930, 1.442695
        %v1024 = vpow.pop %v1023
        %v1025 = vmul.f32 %v931, 1.442695
        %v1026 = vpow.pop %v1025
        %v1027 = vmul.f32 %v932, 1.442695
        %v1028 = vpow.pop %v1027
        %v1029 = vmul.f32 %v933, 1.442695
        %v1030 = vpow.pop %v1029
        %v1031 = vmul.f32 %v934, 1.442695
        %v1032 = vpow.pop %v1031
        %v1033 = vmul.f32 %v935, 1.442695
        %v1034 = vpow.pop %v1033
        %v1035 = vmul.f32 %v936, 1.442695
        %v1036 = vpow.pop %v1035
        %v1037 = vmul.f32 %v937, 1.442695
        %v1038 = vpow.pop %v1037
        %v1039 = vmul.f32 %v938, 1.442695
        %v1040 = vpow.pop %v1039
        %v1041 = vmul.f32 %v939, 1.442695
        %v1042 = vpow.pop %v1041
        %v1043 = vmul.f32 %v940, 1.442695
        %v1044 = vpow.pop %v1043
        %v1045 = vmul.f32 %v941, 1.442695
        %v1046 = vpow.pop %v1045
        %v1047 = vmul.f32 %v942, 1.442695
        %v1048 = vpow.pop %v1047
        %v1049 = vmul.f32 %v943, 1.442695
        %v1050 = vpow.pop %v1049
        %v1051 = vmul.f32 %v944, 1.442695
        %v1052 = vpow.pop %v1051
        %v1053 = vmul.f32 %v945, 1.442695
        %v1054 = vpow.pop %v1053
        %v1055 = vmul.f32 %v946, 1.442695
        %v1056 = vpow.pop %v1055
        %v1057 = vmul.f32 %v947, 1.442695
        %v1058 = vpow.pop %v1057
        %v1059 = vmul.f32 %v948, 1.442695
        %v1060 = vpow.pop %v1059
        %v1061 = vmul.f32 %v949, 1.442695
        %v1062 = vpow.pop %v1061
        %v1063 = vmul.f32 %v950, 1.442695
        %v1064 = vpow.pop %v1063
        %v1065 = vmul.f32 %v951, 1.442695
        %v1066 = vpow.pop %v1065
        %v1067 = vmul.f32 %v952, 1.442695
        %v1068 = vpow.pop %v1067
        %v1069 = vmul.f32 %v953, 1.442695
        %v1070 = vpow.pop %v1069
        %v1071 = vmul.f32 %v954, 1.442695
        %v1072 = vpow.pop %v1071
        %v1073 = vmul.f32 %v955, 1.442695
        %v1074 = vpow.pop %v1073
        %v1075 = vmul.f32 %v956, 1.442695
        %v1076 = vpow.pop %v1075
        %v1077 = vmul.f32 %v957, 1.442695
        %v1078 = vpow.pop %v1077
        %v1079 = vmul.f32 %v958, 1.442695
        %v1080 = vpow.pop %v1079
        %v1081 = vmul.f32 %v959, 1.442695
        %v1082 = vpow.pop %v1081
        %v1083 = vmul.f32 %v960, 1.442695
        %v1084 = vpow.pop %v1083
        %v1085 = vmul.f32 %v961, 1.442695
        %v1086 = vpow.pop %v1085
        %v1087 = vmul.f32 %v962, 1.442695
        %v1088 = vpow.pop %v1087
        %v1089 = vmul.f32 %v963, 1.442695
        %v1090 = vpow.pop %v1089
        %v1091 = vmul.f32 %v964, 1.442695
        %v1092 = vpow.pop %v1091
        %v1093 = vadd.f32 %v966, %v968
        %1094 = vadd.xlane.f32.xlu0 %v1093
        %v1095 = vpop.xlane.xlu0 %1094
        %v1096 = vadd.f32 %v970, %v972
        %1097 = vadd.xlane.f32.xlu0 %v1096
        %v1098 = vpop.xlane.xlu0 %1097
        %v1099 = vadd.f32 %v974, %v976
        %1100 = vadd.xlane.f32.xlu0 %v1099
        %v1101 = vpop.xlane.xlu0 %1100
        %v1102 = vadd.f32 %v978, %v980
        %1103 = vadd.xlane.f32.xlu0 %v1102
        %v1104 = vpop.xlane.xlu0 %1103
        %v1105 = vadd.f32 %v982, %v984
        %1106 = vadd.xlane.f32.xlu0 %v1105
        %v1107 = vpop.xlane.xlu0 %1106
        %v1108 = vadd.f32 %v986, %v988
        %1109 = vadd.xlane.f32.xlu0 %v1108
        %v1110 = vpop.xlane.xlu0 %1109
        %v1111 = vadd.f32 %v990, %v992
        %1112 = vadd.xlane.f32.xlu0 %v1111
        %v1113 = vpop.xlane.xlu0 %1112
        %v1114 = vadd.f32 %v994, %v996
        %1115 = vadd.xlane.f32.xlu0 %v1114
        %v1116 = vpop.xlane.xlu0 %1115
        %v1117 = vadd.f32 %v998, %v1000
        %1118 = vadd.xlane.f32.xlu0 %v1117
        %v1119 = vpop.xlane.xlu0 %1118
        %v1120 = vadd.f32 %v1002, %v1004
        %1121 = vadd.xlane.f32.xlu0 %v1120
        %v1122 = vpop.xlane.xlu0 %1121
        %v1123 = vadd.f32 %v1006, %v1008
        %1124 = vadd.xlane.f32.xlu0 %v1123
        %v1125 = vpop.xlane.xlu0 %1124
        %v1126 = vadd.f32 %v1010, %v1012
        %1127 = vadd.xlane.f32.xlu0 %v1126
        %v1128 = vpop.xlane.xlu0 %1127
        %v1129 = vadd.f32 %v1014, %v1016
        %1130 = vadd.xlane.f32.xlu0 %v1129
        %v1131 = vpop.xlane.xlu0 %1130
        %v1132 = vadd.f32 %v1018, %v1020
        %1133 = vadd.xlane.f32.xlu0 %v1132
        %v1134 = vpop.xlane.xlu0 %1133
        %v1135 = vadd.f32 %v1022, %v1024
        %1136 = vadd.xlane.f32.xlu0 %v1135
        %v1137 = vpop.xlane.xlu0 %1136
        %v1138 = vadd.f32 %v1026, %v1028
        %1139 = vadd.xlane.f32.xlu0 %v1138
        %v1140 = vpop.xlane.xlu0 %1139
        %v1141 = vadd.f32 %v1030, %v1032
        %1142 = vadd.xlane.f32.xlu0 %v1141
        %v1143 = vpop.xlane.xlu0 %1142
        %v1144 = vadd.f32 %v1034, %v1036
        %1145 = vadd.xlane.f32.xlu0 %v1144
        %v1146 = vpop.xlane.xlu0 %1145
        %v1147 = vadd.f32 %v1038, %v1040
        %1148 = vadd.xlane.f32.xlu0 %v1147
        %v1149 = vpop.xlane.xlu0 %1148
        %v1150 = vadd.f32 %v1042, %v1044
        %1151 = vadd.xlane.f32.xlu0 %v1150
        %v1152 = vpop.xlane.xlu0 %1151
        %v1153 = vadd.f32 %v1046, %v1048
        %1154 = vadd.xlane.f32.xlu0 %v1153
        %v1155 = vpop.xlane.xlu0 %1154
        %v1156 = vadd.f32 %v1050, %v1052
        %1157 = vadd.xlane.f32.xlu0 %v1156
        %v1158 = vpop.xlane.xlu0 %1157
        %v1159 = vadd.f32 %v1054, %v1056
        %1160 = vadd.xlane.f32.xlu0 %v1159
        %v1161 = vpop.xlane.xlu0 %1160
        %v1162 = vadd.f32 %v1058, %v1060
        %1163 = vadd.xlane.f32.xlu0 %v1162
        %v1164 = vpop.xlane.xlu0 %1163
        %v1165 = vadd.f32 %v1062, %v1064
        %1166 = vadd.xlane.f32.xlu0 %v1165
        %v1167 = vpop.xlane.xlu0 %1166
        %v1168 = vadd.f32 %v1066, %v1068
        %1169 = vadd.xlane.f32.xlu0 %v1168
        %v1170 = vpop.xlane.xlu0 %1169
        %v1171 = vadd.f32 %v1070, %v1072
        %1172 = vadd.xlane.f32.xlu0 %v1171
        %v1173 = vpop.xlane.xlu0 %1172
        %v1174 = vadd.f32 %v1074, %v1076
        %1175 = vadd.xlane.f32.xlu0 %v1174
        %v1176 = vpop.xlane.xlu0 %1175
        %v1177 = vadd.f32 %v1078, %v1080
        %1178 = vadd.xlane.f32.xlu0 %v1177
        %v1179 = vpop.xlane.xlu0 %1178
        %v1180 = vadd.f32 %v1082, %v1084
        %1181 = vadd.xlane.f32.xlu0 %v1180
        %v1182 = vpop.xlane.xlu0 %1181
        %v1183 = vadd.f32 %v1086, %v1088
        %1184 = vadd.xlane.f32.xlu0 %v1183
        %v1185 = vpop.xlane.xlu0 %1184
        %v1186 = vadd.f32 %v1090, %v1092
        %1187 = vadd.xlane.f32.xlu0 %v1186
        %v1188 = vpop.xlane.xlu0 %1187
        %v1189 = vrcp.pop %v1095
        %v1190 = vmul.f32 %v966, %v1189
        %v1191 = vmul.f32 %v968, %v1189
        %v1192 = vrcp.pop %v1098
        %v1193 = vmul.f32 %v970, %v1192
        %v1194 = vmul.f32 %v972, %v1192
        %v1195 = vrcp.pop %v1101
        %v1196 = vmul.f32 %v974, %v1195
        %v1197 = vmul.f32 %v976, %v1195
        %v1198 = vrcp.pop %v1104
        %v1199 = vmul.f32 %v978, %v1198
        %v1200 = vmul.f32 %v980, %v1198
        %v1201 = vrcp.pop %v1107
        %v1202 = vmul.f32 %v982, %v1201
        %v1203 = vmul.f32 %v984, %v1201
        %v1204 = vrcp.pop %v1110
        %v1205 = vmul.f32 %v986, %v1204
        %v1206 = vmul.f32 %v988, %v1204
        %v1207 = vrcp.pop %v1113
        %v1208 = vmul.f32 %v990, %v1207
        %v1209 = vmul.f32 %v992, %v1207
        %v1210 = vrcp.pop %v1116
        %v1211 = vmul.f32 %v994, %v1210
        %v1212 = vmul.f32 %v996, %v1210
        %v1213 = vrcp.pop %v1119
        %v1214 = vmul.f32 %v998, %v1213
        %v1215 = vmul.f32 %v1000, %v1213
        %v1216 = vrcp.pop %v1122
        %v1217 = vmul.f32 %v1002, %v1216
        %v1218 = vmul.f32 %v1004, %v1216
        %v1219 = vrcp.pop %v1125
        %v1220 = vmul.f32 %v1006, %v1219
        %v1221 = vmul.f32 %v1008, %v1219
        %v1222 = vrcp.pop %v1128
        %v1223 = vmul.f32 %v1010, %v1222
        %v1224 = vmul.f32 %v1012, %v1222
        %v1225 = vrcp.pop %v1131
        %v1226 = vmul.f32 %v1014, %v1225
        %v1227 = vmul.f32 %v1016, %v1225
        %v1228 = vrcp.pop %v1134
        %v1229 = vmul.f32 %v1018, %v1228
        %v1230 = vmul.f32 %v1020, %v1228
        %v1231 = vrcp.pop %v1137
        %v1232 = vmul.f32 %v1022, %v1231
        %v1233 = vmul.f32 %v1024, %v1231
        %v1234 = vrcp.pop %v1140
        %v1235 = vmul.f32 %v1026, %v1234
        %v1236 = vmul.f32 %v1028, %v1234
        %v1237 = vrcp.pop %v1143
        %v1238 = vmul.f32 %v1030, %v1237
        %v1239 = vmul.f32 %v1032, %v1237
        %v1240 = vrcp.pop %v1146
        %v1241 = vmul.f32 %v1034, %v1240
        %v1242 = vmul.f32 %v1036, %v1240
        %v1243 = vrcp.pop %v1149
        %v1244 = vmul.f32 %v1038, %v1243
        %v1245 = vmul.f32 %v1040, %v1243
        %v1246 = vrcp.pop %v1152
        %v1247 = vmul.f32 %v1042, %v1246
        %v1248 = vmul.f32 %v1044, %v1246
        %v1249 = vrcp.pop %v1155
        %v1250 = vmul.f32 %v1046, %v1249
        %v1251 = vmul.f32 %v1048, %v1249
        %v1252 = vrcp.pop %v1158
        %v1253 = vmul.f32 %v1050, %v1252
        %v1254 = vmul.f32 %v1052, %v1252
        %v1255 = vrcp.pop %v1161
        %v1256 = vmul.f32 %v1054, %v1255
        %v1257 = vmul.f32 %v1056, %v1255
        %v1258 = vrcp.pop %v1164
        %v1259 = vmul.f32 %v1058, %v1258
        %v1260 = vmul.f32 %v1060, %v1258
        %v1261 = vrcp.pop %v1167
        %v1262 = vmul.f32 %v1062, %v1261
        %v1263 = vmul.f32 %v1064, %v1261
        %v1264 = vrcp.pop %v1170
        %v1265 = vmul.f32 %v1066, %v1264
        %v1266 = vmul.f32 %v1068, %v1264
        %v1267 = vrcp.pop %v1173
        %v1268 = vmul.f32 %v1070, %v1267
        %v1269 = vmul.f32 %v1072, %v1267
        %v1270 = vrcp.pop %v1176
        %v1271 = vmul.f32 %v1074, %v1270
        %v1272 = vmul.f32 %v1076, %v1270
        %v1273 = vrcp.pop %v1179
        %v1274 = vmul.f32 %v1078, %v1273
        %v1275 = vmul.f32 %v1080, %v1273
        %v1276 = vrcp.pop %v1182
        %v1277 = vmul.f32 %v1082, %v1276
        %v1278 = vmul.f32 %v1084, %v1276
        %v1279 = vrcp.pop %v1185
        %v1280 = vmul.f32 %v1086, %v1279
        %v1281 = vmul.f32 %v1088, %v1279
        %v1282 = vrcp.pop %v1188
        %v1283 = vmul.f32 %v1090, %v1282
        %v1284 = vmul.f32 %v1092, %v1282
        %1285 = vst [vmem:[%s383] sm:$0xff] %v1190
        %1286 = vst [vmem:[%s383 + $0x8] sm:$0xff] %v1191
        %1287 = vst [vmem:[%s383 + $0x10] sm:$0xff] %v1193
        %1288 = vst [vmem:[%s383 + $0x18] sm:$0xff] %v1194
        %1289 = vst [vmem:[%s383 + $0x20] sm:$0xff] %v1196
        %1290 = vst [vmem:[%s383 + $0x28] sm:$0xff] %v1197
        %1291 = vst [vmem:[%s383 + $0x30] sm:$0xff] %v1199
        %1292 = vst [vmem:[%s383 + $0x38] sm:$0xff] %v1200
        %1293 = vst [vmem:[%s383 + $0x40] sm:$0xff] %v1202
        %1294 = vst [vmem:[%s383 + $0x48] sm:$0xff] %v1203
        %1295 = vst [vmem:[%s383 + $0x50] sm:$0xff] %v1205
        %1296 = vst [vmem:[%s383 + $0x58] sm:$0xff] %v1206
        %1297 = vst [vmem:[%s383 + $0x60] sm:$0xff] %v1208
        %1298 = vst [vmem:[%s383 + $0x68] sm:$0xff] %v1209
        %1299 = vst [vmem:[%s383 + $0x70] sm:$0xff] %v1211
        %1300 = vst [vmem:[%s383 + $0x78] sm:$0xff] %v1212
        %1301 = vst [vmem:[%s383 + $0x80] sm:$0xff] %v1214
        %1302 = vst [vmem:[%s383 + $0x88] sm:$0xff] %v1215
        %1303 = vst [vmem:[%s383 + $0x90] sm:$0xff] %v1217
        %1304 = vst [vmem:[%s383 + $0x98] sm:$0xff] %v1218
        %1305 = vst [vmem:[%s383 + $0xa0] sm:$0xff] %v1220
        %1306 = vst [vmem:[%s383 + $0xa8] sm:$0xff] %v1221
        %1307 = vst [vmem:[%s383 + $0xb0] sm:$0xff] %v1223
        %1308 = vst [vmem:[%s383 + $0xb8] sm:$0xff] %v1224
        %1309 = vst [vmem:[%s383 + $0xc0] sm:$0xff] %v1226
        %1310 = vst [vmem:[%s383 + $0xc8] sm:$0xff] %v1227
        %1311 = vst [vmem:[%s383 + $0xd0] sm:$0xff] %v1229
        %1312 = vst [vmem:[%s383 + $0xd8] sm:$0xff] %v1230
        %1313 = vst [vmem:[%s383 + $0xe0] sm:$0xff] %v1232
        %1314 = vst [vmem:[%s383 + $0xe8] sm:$0xff] %v1233
        %1315 = vst [vmem:[%s383 + $0xf0] sm:$0xff] %v1235
        %1316 = vst [vmem:[%s383 + $0xf8] sm:$0xff] %v1236
        %1317 = vst [vmem:[%s383 + $0x100] sm:$0xff] %v1238
        %1318 = vst [vmem:[%s383 + $0x108] sm:$0xff] %v1239
        %1319 = vst [vmem:[%s383 + $0x110] sm:$0xff] %v1241
        %1320 = vst [vmem:[%s383 + $0x118] sm:$0xff] %v1242
        %1321 = vst [vmem:[%s383 + $0x120] sm:$0xff] %v1244
        %1322 = vst [vmem:[%s383 + $0x128] sm:$0xff] %v1245
        %1323 = vst [vmem:[%s383 + $0x130] sm:$0xff] %v1247
        %1324 = vst [vmem:[%s383 + $0x138] sm:$0xff] %v1248
        %1325 = vst [vmem:[%s383 + $0x140] sm:$0xff] %v1250
        %1326 = vst [vmem:[%s383 + $0x148] sm:$0xff] %v1251
        %1327 = vst [vmem:[%s383 + $0x150] sm:$0xff] %v1253
        %1328 = vst [vmem:[%s383 + $0x158] sm:$0xff] %v1254
        %1329 = vst [vmem:[%s383 + $0x160] sm:$0xff] %v1256
        %1330 = vst [vmem:[%s383 + $0x168] sm:$0xff] %v1257
        %1331 = vst [vmem:[%s383 + $0x170] sm:$0xff] %v1259
        %1332 = vst [vmem:[%s383 + $0x178] sm:$0xff] %v1260
        %1333 = vst [vmem:[%s383 + $0x180] sm:$0xff] %v1262
        %1334 = vst [vmem:[%s383 + $0x188] sm:$0xff] %v1263
        %1335 = vst [vmem:[%s383 + $0x190] sm:$0xff] %v1265
        %1336 = vst [vmem:[%s383 + $0x198] sm:$0xff] %v1266
        %1337 = vst [vmem:[%s383 + $0x1a0] sm:$0xff] %v1268
        %1338 = vst [vmem:[%s383 + $0x1a8] sm:$0xff] %v1269
        %1339 = vst [vmem:[%s383 + $0x1b0] sm:$0xff] %v1271
        %1340 = vst [vmem:[%s383 + $0x1b8] sm:$0xff] %v1272
        %1341 = vst [vmem:[%s383 + $0x1c0] sm:$0xff] %v1274
        %1342 = vst [vmem:[%s383 + $0x1c8] sm:$0xff] %v1275
        %1343 = vst [vmem:[%s383 + $0x1d0] sm:$0xff] %v1277
        %1344 = vst [vmem:[%s383 + $0x1d8] sm:$0xff] %v1278
        %1345 = vst [vmem:[%s383 + $0x1e0] sm:$0xff] %v1280
        %1346 = vst [vmem:[%s383 + $0x1e8] sm:$0xff] %v1281
        %1347 = vst [vmem:[%s383 + $0x1f0] sm:$0xff] %v1283
        %1348 = vst [vmem:[%s383 + $0x1f8] sm:$0xff] %v1284
        %v1349 = vld [vmem:[%s338] sm:$0xff]
        %v1350 = vld [vmem:[%s338 + $0x8] sm:$0xff]
        %v1351 = vld [vmem:[%s338 + $0x10] sm:$0xff]
        %v1352 = vld [vmem:[%s338 + $0x18] sm:$0xff]
        %v1353 = vld [vmem:[%s338 + $0x20] sm:$0xff]
        %v1354 = vld [vmem:[%s338 + $0x28] sm:$0xff]
        %v1355 = vld [vmem:[%s338 + $0x30] sm:$0xff]
        %v1356 = vld [vmem:[%s338 + $0x38] sm:$0xff]
        %v1357 = vpack.c.bf16 %v1193, %v1190
        %v1358 = vpack.c.bf16 %v1194, %v1191
        %v1359 = vpack.c.bf16 %v1199, %v1196
        %v1360 = vpack.c.bf16 %v1200, %v1197
        %v1361 = vpack.c.bf16 %v1205, %v1202
        %v1362 = vpack.c.bf16 %v1206, %v1203
        %v1363 = vpack.c.bf16 %v1211, %v1208
        %v1364 = vpack.c.bf16 %v1212, %v1209
        %v1365 = vpack.c.bf16 %v1217, %v1214
        %v1366 = vpack.c.bf16 %v1218, %v1215
        %v1367 = vpack.c.bf16 %v1223, %v1220
        %v1368 = vpack.c.bf16 %v1224, %v1221
        %v1369 = vpack.c.bf16 %v1229, %v1226
        %v1370 = vpack.c.bf16 %v1230, %v1227
        %v1371 = vpack.c.bf16 %v1235, %v1232
        %v1372 = vpack.c.bf16 %v1236, %v1233
        %v1373 = vpack.c.bf16 %v1241, %v1238
        %v1374 = vpack.c.bf16 %v1242, %v1239
        %v1375 = vpack.c.bf16 %v1247, %v1244
        %v1376 = vpack.c.bf16 %v1248, %v1245
        %v1377 = vpack.c.bf16 %v1253, %v1250
        %v1378 = vpack.c.bf16 %v1254, %v1251
        %v1379 = vpack.c.bf16 %v1259, %v1256
        %v1380 = vpack.c.bf16 %v1260, %v1257
        %v1381 = vpack.c.bf16 %v1265, %v1262
        %v1382 = vpack.c.bf16 %v1266, %v1263
        %v1383 = vpack.c.bf16 %v1271, %v1268
        %v1384 = vpack.c.bf16 %v1272, %v1269
        %v1385 = vpack.c.bf16 %v1277, %v1274
        %v1386 = vpack.c.bf16 %v1278, %v1275
        %v1387 = vpack.c.bf16 %v1283, %v1280
        %v1388 = vpack.c.bf16 %v1284, %v1281
        %v1397 = vunpack.c.l.b16 %v1349
        %v1398 = vunpack.c.h.b16 %v1349
        %v1399 = vunpack.c.l.b16 %v1350
        %v1400 = vunpack.c.h.b16 %v1350
        %v1401 = vunpack.c.l.b16 %v1351
        %v1402 = vunpack.c.h.b16 %v1351
        %v1403 = vunpack.c.l.b16 %v1352
        %v1404 = vunpack.c.h.b16 %v1352
        %v1405 = vunpack.c.l.b16 %v1353
        %v1406 = vunpack.c.h.b16 %v1353
        %v1407 = vunpack.c.l.b16 %v1354
        %v1408 = vunpack.c.h.b16 %v1354
        %v1409 = vunpack.c.l.b16 %v1355
        %v1410 = vunpack.c.h.b16 %v1355
        %v1411 = vunpack.c.l.b16 %v1356
        %v1412 = vunpack.c.h.b16 %v1356
        %v1413 = vpack.c.b16 %v1399, %v1397
        %v1414 = vpack.c.b16 %v1400, %v1398
        %v1415 = vpack.c.b16 %v1403, %v1401
        %v1416 = vpack.c.b16 %v1404, %v1402
        %v1417 = vpack.c.b16 %v1407, %v1405
        %v1418 = vpack.c.b16 %v1408, %v1406
        %v1419 = vpack.c.b16 %v1411, %v1409
        %v1420 = vpack.c.b16 %v1412, %v1410
        %1429 = vmatprep.subr.bf16.mxu0 %v1372
        %1430 = vmatpush1.bf16.xpose.msra.mxu0 %v1371
        %1431 = vmatprep.subr.bf16.mxu0 %v1370
        %1432 = vmatpush1.bf16.xpose.msra.mxu0 %v1369
        %1433 = vmatprep.subr.bf16.mxu0 %v1368
        %1434 = vmatpush1.bf16.xpose.msra.mxu0 %v1367
        %1435 = vmatprep.subr.bf16.mxu0 %v1366
        %1436 = vmatpush1.bf16.xpose.msra.mxu0 %v1365
        %1437 = vmatprep.subr.bf16.mxu0 %v1364
        %1438 = vmatpush1.bf16.xpose.msra.mxu0 %v1363
        %1439 = vmatprep.subr.bf16.mxu0 %v1362
        %1440 = vmatpush1.bf16.xpose.msra.mxu0 %v1361
        %1441 = vmatprep.subr.bf16.mxu0 %v1360
        %1442 = vmatpush1.bf16.xpose.msra.mxu0 %v1359
        %1443 = vmatprep.subr.bf16.mxu0 %v1358
        %1444 = vmatpush1.bf16.xpose.msra.mxu0 %v1357
        %1445 = vmatprep.subr.bf16.mxu0 %v1388
        %1446 = vmatpush2.bf16.xpose.msra.mxu0 %v1387
        %1447 = vmatprep.subr.bf16.mxu0 %v1386
        %1448 = vmatpush2.bf16.xpose.msra.mxu0 %v1385
        %1449 = vmatprep.subr.bf16.mxu0 %v1384
        %1450 = vmatpush2.bf16.xpose.msra.mxu0 %v1383
        %1451 = vmatprep.subr.bf16.mxu0 %v1382
        %1452 = vmatpush2.bf16.xpose.msra.mxu0 %v1381
        %1453 = vmatprep.subr.bf16.mxu0 %v1380
        %1454 = vmatpush2.bf16.xpose.msra.mxu0 %v1379
        %1455 = vmatprep.subr.bf16.mxu0 %v1378
        %1456 = vmatpush2.bf16.xpose.msra.mxu0 %v1377
        %1457 = vmatprep.subr.bf16.mxu0 %v1376
        %1458 = vmatpush2.bf16.xpose.msra.mxu0 %v1375
        %1459 = vmatprep.subr.bf16.mxu0 %v1374
        %1460 = vmatpush2.bf16.xpose.msra.mxu0 %v1373
        %1461 = vmatprep.mubr.bf16.mxu0 %v1414
        %1462 = vmatmul.mubr.bf16.gmra.mxu0 %v1413
        %v1463 = vpop.f32.mrf.mxu0
        %v1464 = vadd.f32 0.0, %v1463
        %v1465 = vpop.f32.mrf.mxu0
        %v1466 = vadd.f32 0.0, %v1465
        %v1467 = vpop.f32.mrf.mxu0
        %v1468 = vadd.f32 0.0, %v1467
        %v1469 = vpop.f32.mrf.mxu0
        %v1470 = vadd.f32 0.0, %v1469
        %1471 = vmatprep.mubr.bf16.mxu0 %v1416
        %1472 = vmatmul.mubr.bf16.gmra.mxu0 %v1415
        %v1473 = vpop.f32.mrf.mxu0
        %v1474 = vadd.f32 0.0, %v1473
        %v1475 = vpop.f32.mrf.mxu0
        %v1476 = vadd.f32 0.0, %v1475
        %v1477 = vpop.f32.mrf.mxu0
        %v1478 = vadd.f32 0.0, %v1477
        %v1479 = vpop.f32.mrf.mxu0
        %v1480 = vadd.f32 0.0, %v1479
        %1481 = vmatprep.mubr.bf16.mxu0 %v1418
        %1482 = vmatmul.mubr.bf16.gmra.mxu0 %v1417
        %v1483 = vpop.f32.mrf.mxu0
        %v1484 = vadd.f32 0.0, %v1483
        %v1485 = vpop.f32.mrf.mxu0
        %v1486 = vadd.f32 0.0, %v1485
        %v1487 = vpop.f32.mrf.mxu0
        %v1488 = vadd.f32 0.0, %v1487
        %v1489 = vpop.f32.mrf.mxu0
        %v1490 = vadd.f32 0.0, %v1489
        %1491 = vmatprep.mubr.bf16.mxu0 %v1420
        %1492 = vmatmul.mubr.bf16.gmra.mxu0 %v1419
        %v1493 = vpop.f32.mrf.mxu0
        %v1494 = vadd.f32 0.0, %v1493
        %v1495 = vpop.f32.mrf.mxu0
        %v1496 = vadd.f32 0.0, %v1495
        %v1497 = vpop.f32.mrf.mxu0
        %v1498 = vadd.f32 0.0, %v1497
        %v1499 = vpop.f32.mrf.mxu0
        %v1500 = vadd.f32 0.0, %v1499
        %1501 = vdwg.mxu0
        %s1502 = sld [smem:[#allocation2]]
        %v1503 = vstv %s1502
        %v1504 = vmul.f32 %v1503, %v1464
        %v1505 = vmul.f32 %v1503, %v1466
        %v1506 = vmul.f32 %v1503, %v1468
        %v1507 = vmul.f32 %v1503, %v1470
        %v1508 = vmul.f32 %v1503, %v1474
        %v1509 = vmul.f32 %v1503, %v1476
        %v1510 = vmul.f32 %v1503, %v1478
        %v1511 = vmul.f32 %v1503, %v1480
        %v1512 = vmul.f32 %v1503, %v1484
        %v1513 = vmul.f32 %v1503, %v1486
        %v1514 = vmul.f32 %v1503, %v1488
        %v1515 = vmul.f32 %v1503, %v1490
        %v1516 = vmul.f32 %v1503, %v1494
        %v1517 = vmul.f32 %v1503, %v1496
        %v1518 = vmul.f32 %v1503, %v1498
        %v1519 = vmul.f32 %v1503, %v1500
        %v1520 = vadd.f32 %v1504, %v393
        %v1521 = vadd.f32 %v1505, %v394
        %v1522 = vadd.f32 %v1506, %v395
        %v1523 = vadd.f32 %v1507, %v396
        %v1524 = vadd.f32 %v1508, %v397
        %v1525 = vadd.f32 %v1509, %v398
        %v1526 = vadd.f32 %v1510, %v399
        %v1527 = vadd.f32 %v1511, %v400
        %v1528 = vadd.f32 %v1512, %v401
        %v1529 = vadd.f32 %v1513, %v402
        %v1530 = vadd.f32 %v1514, %v403
        %v1531 = vadd.f32 %v1515, %v404
        %v1532 = vadd.f32 %v1516, %v405
        %v1533 = vadd.f32 %v1517, %v406
        %v1534 = vadd.f32 %v1518, %v407
        %v1535 = vadd.f32 %v1519, %v408
        %1536 = vst [vmem:[%s376] sm:$0xff] %v1520
        %1537 = vst [vmem:[%s376 + $0x8] sm:$0xff] %v1521
        %1538 = vst [vmem:[%s376 + $0x10] sm:$0xff] %v1522
        %1539 = vst [vmem:[%s376 + $0x18] sm:$0xff] %v1523
        %1540 = vst [vmem:[%s376 + $0x20] sm:$0xff] %v1524
        %1541 = vst [vmem:[%s376 + $0x28] sm:$0xff] %v1525
        %1542 = vst [vmem:[%s376 + $0x30] sm:$0xff] %v1526
        %1543 = vst [vmem:[%s376 + $0x38] sm:$0xff] %v1527
        %1544 = vst [vmem:[%s376 + $0x40] sm:$0xff] %v1528
        %1545 = vst [vmem:[%s376 + $0x48] sm:$0xff] %v1529
        %1546 = vst [vmem:[%s376 + $0x50] sm:$0xff] %v1530
        %1547 = vst [vmem:[%s376 + $0x58] sm:$0xff] %v1531
        %1548 = vst [vmem:[%s376 + $0x60] sm:$0xff] %v1532
        %1549 = vst [vmem:[%s376 + $0x68] sm:$0xff] %v1533
        %1550 = vst [vmem:[%s376 + $0x70] sm:$0xff] %v1534
        %1551 = vst [vmem:[%s376 + $0x78] sm:$0xff] %v1535
        %s1552 = sand.u32 %s197, 1
        %s1553 = scalar_lea.sflag [#allocation5], %s1552
        %s1554 = sand.u32 %s197, 1
        %s1555 = smul.addr %s1554, 128
        %s1556 = scalar_lea.vmem [#allocation8], %s1555
        %s1557 = sand.u32 %s225, 1
        %s1558 = scalar_lea.sflag [#allocation10], %s1557
        %s1559 = sand.u32 %s225, 1
        %s1560 = smul.addr %s1559, 512
        %s1561 = scalar_lea.vmem [#allocation9], %s1560
        // Predicated region
        $region53: #{tpu_custom_call.1} parent=43 // pred_check
          %p1562 = pneg %p207
        $region54: #{tpu_custom_call.1} parent=43 // pred_check_branch
          %1564 = sbr.rel (%p1562) target = $region56
        $region55: #{tpu_custom_call.1} parent=43 // pred_region
          %s1565 = smul.u32 2, %s37
          %s1567 = ssub.s32 2048, 2048
          %1568 = vsyncadd %s1553, %s1567
          %s1569 = smul.addr %s36, 16
          %s1570 = sadd.s32 %s1565, %s1569
          %s1571 = smul.addr %s1570, 128
          %s1572 = scalar_lea.hbm %s6, %s1571
          %s1573 = sshll.u32 %s1556, 4
          %s1574 = int_to_ptr.vmem [resolvable:$true] %s1573
          %1579 = dma.vmem_to_hbm [thread:$0]  %s1574, 2048, %s1572, %s1553, 256, 256, 16
        $region56: #{tpu_custom_call.1} parent=43 // pred_fallthru
          _
        // Predicated region
        $region57: #{tpu_custom_call.1} parent=43 // pred_check
          %p1580 = pneg %p235
        $region58: #{tpu_custom_call.1} parent=43 // pred_check_branch
          %1582 = sbr.rel (%p1580) target = $region60
        $region59: #{tpu_custom_call.1} parent=43 // pred_region
          %s1583 = smul.u32 32, %s37
          %s1585 = ssub.s32 8192, 8192
          %1586 = vsyncadd %s1558, %s1585
          %s1587 = smul.addr %s1583, 2
          %s1588 = smul.addr %s36, 64
          %s1589 = sadd.s32 %s1587, %s1588
          %s1590 = smul.addr %s1589, 128
          %s1591 = scalar_lea.hbm %s7, %s1590
          %s1592 = sshll.u32 %s1561, 4
          %s1593 = int_to_ptr.vmem [resolvable:$true] %s1592
          %1598 = dma.vmem_to_hbm [thread:$0]  %s1593, 8192, %s1591, %s1558, 256, 256, 16
        $region60: #{tpu_custom_call.1} parent=43 // pred_fallthru
          _
      $region44: #{tpu_custom_call.1} parent=5 // pred_fallthru
        _
      %p1599 = scmp.le.s32.totalorder 2, %s27
      // Predicated region
      $region61: #{tpu_custom_call.1} parent=5 // pred_check
        %p1600 = pneg %p1599
      $region62: #{tpu_custom_call.1} parent=5 // pred_check_branch
        %1602 = sbr.rel (%p1600) target = $region64
      $region63: #{tpu_custom_call.1} parent=5 // pred_region
        %s1603 = ssub.s32 %s27, 2
        // Predicated region
        $region65: #{tpu_custom_call.1} parent=63 // pred_check
          %p1604 = pneg %p213
        $region66: #{tpu_custom_call.1} parent=63 // pred_check_branch
          %1606 = sbr.rel (%p1604) target = $region68
        $region67: #{tpu_custom_call.1} parent=63 // pred_region
          %s1607 = sand.u32 %s198, 1
          %s1608 = scalar_lea.sflag [#allocation5], %s1607
          %s1609 = sand.u32 %s198, 1
          %s1610 = smul.addr %s1609, 128
          %s1611 = scalar_lea.vmem [#allocation8], %s1610
          %1612 = dma.done %s1608, 2048
        $region68: #{tpu_custom_call.1} parent=63 // pred_fallthru
          _
        // Predicated region
        $region69: #{tpu_custom_call.1} parent=63 // pred_check
          %p1613 = pneg %p241
        $region70: #{tpu_custom_call.1} parent=63 // pred_check_branch
          %1615 = sbr.rel (%p1613) target = $region72
        $region71: #{tpu_custom_call.1} parent=63 // pred_region
          %s1616 = sand.u32 %s226, 1
          %s1617 = scalar_lea.sflag [#allocation10], %s1616
          %s1618 = sand.u32 %s226, 1
          %s1619 = smul.addr %s1618, 512
          %s1620 = scalar_lea.vmem [#allocation9], %s1619
          %1621 = dma.done %s1617, 8192
        $region72: #{tpu_custom_call.1} parent=63 // pred_fallthru
          _
      $region64: #{tpu_custom_call.1} parent=5 // pred_fallthru
        _
    $region6: #{tpu_custom_call.1} parent=1 // loop_footer
      %s31 = sadd.s32 1, %s27
    $region7: #{tpu_custom_call.1} parent=1 // loop_footer_branch
      %26 = sbr.rel target = $region3
    $region8: #{tpu_custom_call.1} parent=1 // loop_exit
      _
    %1622 = vsyncpa [#allocation4], 1
    %s1623 = scalar_lea.sflag [#allocation4], 1
    %1624 = vsyncpa %s1623, 1
    %1625 = vsyncpa [#allocation7], 1
    %s1626 = scalar_lea.sflag [#allocation7], 1
    %1627 = vsyncpa %s1626, 1
    %1628 = vsyncpa [#allocation5], 1
    %s1629 = scalar_lea.sflag [#allocation5], 1
    %1630 = vsyncpa %s1629, 1
    %1631 = vsyncpa [#allocation10], 1
    %s1632 = scalar_lea.sflag [#allocation10], 1
    %1633 = vsyncpa %s1632, 1

</llo_original>
